<compile_context>
chip_gen: v6e
topology: v6e:2x2x1
jax: 0.10.0
libtpu: 0.0.40
codegen_flags: <defaults>
</compile_context>

<pallas_src>
import jax
import jax.numpy as jnp
import numpy as np
from jax.experimental import pallas as pl
from jax.experimental.pallas import tpu as pltpu

EPS = 1e-5
D_IN, D_H, D_OUT = 768, 500, 300
D_H_PAD, D_OUT_PAD = 512, 384        # lane-padded (multiples of 128)


def mlp_kernel(x_ref, w1_ref, b1_ref, w2_ref, b2_ref, o_ref):
    # fc1 (bn1 pre-folded into w1/b1) + relu.  bf16 MXU operands, f32 accumulation.
    x = x_ref[...].astype(jnp.bfloat16)          # no-op cast if x already bf16
    h = jnp.dot(x, w1_ref[...], preferred_element_type=jnp.float32) + b1_ref[...]
    h = jnp.maximum(h, 0.0)
    # fc2 (bn2 pre-folded into w2/b2).
    out = jnp.dot(h.astype(jnp.bfloat16), w2_ref[...],
                  preferred_element_type=jnp.float32) + b2_ref[...]
    o_ref[...] = out.astype(o_ref.dtype)


def fold_and_pad_params(p):
    """Fold BN affine transforms into the adjacent Linear layers, pad lanes, cast bf16."""
    # bn1 folds into fc1's input side:  (x*s1 + t1) @ W1 + b1 = x @ (s1[:,None]*W1) + (t1@W1 + b1)
    s1 = p["bn1_gamma"] * jax.lax.rsqrt(p["bn1_var"] + EPS)          # (1, 768)
    t1 = p["bn1_beta"] - p["bn1_mean"] * s1
    w1f = s1.reshape(-1, 1) * p["w1"]                                # (768, 500)
    b1f = p["b1"] + t1 @ p["w1"]                                     # (1, 500)

    # bn2 sits right before fc2, so it folds into fc2's input side the same way.
    s2 = p["bn2_gamma"] * jax.lax.rsqrt(p["bn2_var"] + EPS)          # (1, 500)
    t2 = p["bn2_beta"] - p["bn2_mean"] * s2
    w2f = s2.reshape(-1, 1) * p["w2"]                                # (500, 300)
    b2f = p["b2"] + t2 @ p["w2"]                                     # (1, 300)

    # Zero-pad to lane-aligned shapes.  Padded hidden columns of w1 / rows of w2 and
    # padded biases are zero, so padded lanes contribute exactly nothing.
    w1p = jnp.zeros((D_IN, D_H_PAD), jnp.float32).at[:, :D_H].set(w1f)
    b1p = jnp.zeros((1, D_H_PAD), jnp.float32).at[:, :D_H].set(b1f)
    w2p = jnp.zeros((D_H_PAD, D_OUT_PAD), jnp.float32).at[:D_H, :D_OUT].set(w2f)
    b2p = jnp.zeros((1, D_OUT_PAD), jnp.float32).at[:, :D_OUT].set(b2f)

    return {
        "w1": w1p.astype(jnp.bfloat16), "b1": b1p,
        "w2": w2p.astype(jnp.bfloat16), "b2": b2p,
    }


def _round_up(x, m):
    return ((x + m - 1) // m) * m


def _choose_batch_tile(B, block_b):
    """Divisor-aware batch tile: minimal padding, >=2 tiles (v7x megacore), 8-sublane
    aligned, 128-row aligned for large tiles (v5e 4x128 MXU)."""
    n_target = max(pl.cdiv(B, block_b), 2)       # >=2 tiles so both v7x TCs get work
    tb = _round_up(pl.cdiv(B, n_target), 8)
    if tb >= 256:
        tb = _round_up(tb, 128)
    return tb


def mlp_forward(x, folded, *, block_b=1024, out_dtype=jnp.float32):
    """x: (B, 768), float32 or bfloat16 (supply bf16 from the producer on v6e to
    halve activation HBM traffic).  Returns a (B, 384) slab; columns [:300] are the
    MLP output and the consumer should index them (avoids an extra HBM slice pass)."""
    B = x.shape[0]
    TB = _choose_batch_tile(B, block_b)
    n_tiles = pl.cdiv(B, TB)                     # ragged last tile handled by Pallas

    # VMEM footprint: double-buffered x/out tiles + resident weights + f32 hidden.
    x_bytes = x.dtype.itemsize
    o_bytes = jnp.dtype(out_dtype).itemsize
    est = (2 * TB * D_IN * x_bytes + 2 * TB * D_OUT_PAD * o_bytes
           + 2 * (D_IN * D_H_PAD + D_H_PAD * D_OUT_PAD) * 2      # bf16 weights, 2 bufs
           + 2 * (D_H_PAD + D_OUT_PAD) * 4                       # f32 biases, 2 bufs
           + TB * D_H_PAD * 4)                                   # f32 hidden scratch
    vmem_limit = int(min(max(int(est * 1.5), 16 << 20), 64 << 20))

    cost = pl.CostEstimate(
        flops=2 * B * (D_IN * D_H_PAD + D_H_PAD * D_OUT_PAD),
        transcendentals=0,
        bytes_accessed=(B * D_IN * x_bytes + B * D_OUT_PAD * o_bytes
                        + (D_IN * D_H_PAD + D_H_PAD * D_OUT_PAD) * 2
                        + (D_H_PAD + D_OUT_PAD) * 4),
    )

    out = pl.pallas_call(
        mlp_kernel,
        out_shape=jax.ShapeDtypeStruct((B, D_OUT_PAD), out_dtype),
        grid=(n_tiles,),
        in_specs=[
            pl.BlockSpec((TB, D_IN), lambda i: (i, 0)),            # x: tiled along batch
            pl.BlockSpec((D_IN, D_H_PAD), lambda i: (0, 0)),       # w1: VMEM-resident
            pl.BlockSpec((1, D_H_PAD), lambda i: (0, 0)),          # b1
            pl.BlockSpec((D_H_PAD, D_OUT_PAD), lambda i: (0, 0)),  # w2
            pl.BlockSpec((1, D_OUT_PAD), lambda i: (0, 0)),        # b2
        ],
        out_specs=pl.BlockSpec((TB, D_OUT_PAD), lambda i: (i, 0)),
        compiler_params=pltpu.CompilerParams(
            dimension_semantics=("parallel",),
            vmem_limit_bytes=vmem_limit,
        ),
        cost_estimate=cost,
    )(x, folded["w1"], folded["b1"], folded["w2"], folded["b2"])

    return out  # (B, D_OUT_PAD); consumer indexes [:, :D_OUT]


def init_params(key):
    ks = jax.random.split(key, 12)
    p = {}
    # Linear layers (PyTorch weight is (out, in); we store (in, out))
    p["w1"] = jax.random.normal(ks[0], (D_IN, D_H), jnp.float32) * 0.02
    p["b1"] = jax.random.normal(ks[1], (1, D_H), jnp.float32) * 0.01
    p["w2"] = jax.random.normal(ks[2], (D_H, D_OUT), jnp.float32) * 0.02
    p["b2"] = jax.random.normal(ks[3], (1, D_OUT), jnp.float32) * 0.01
    # BatchNorm1d(768)
    p["bn1_gamma"] = 1.0 + 0.1 * jax.random.normal(ks[4], (1, D_IN), jnp.float32)
    p["bn1_beta"] = 0.1 * jax.random.normal(ks[5], (1, D_IN), jnp.float32)
    p["bn1_mean"] = 0.1 * jax.random.normal(ks[6], (1, D_IN), jnp.float32)
    p["bn1_var"] = 1.0 + 0.2 * jax.random.uniform(ks[7], (1, D_IN), jnp.float32)
    # BatchNorm1d(500)
    p["bn2_gamma"] = 1.0 + 0.1 * jax.random.normal(ks[8], (1, D_H), jnp.float32)
    p["bn2_beta"] = 0.1 * jax.random.normal(ks[9], (1, D_H), jnp.float32)
    p["bn2_mean"] = 0.1 * jax.random.normal(ks[10], (1, D_H), jnp.float32)
    p["bn2_var"] = 1.0 + 0.2 * jax.random.uniform(ks[11], (1, D_H), jnp.float32)
    return p


def mlp_reference(x, p):
    """Pure-JAX f32 reference of the eval-mode forward (unfolded, unpadded)."""
    s1 = p["bn1_gamma"] * jax.lax.rsqrt(p["bn1_var"] + EPS)
    h = x * s1 + (p["bn1_beta"] - p["bn1_mean"] * s1)
    h = jnp.maximum(h @ p["w1"] + p["b1"], 0.0)
    s2 = p["bn2_gamma"] * jax.lax.rsqrt(p["bn2_var"] + EPS)
    h = h * s2 + (p["bn2_beta"] - p["bn2_mean"] * s2)
    return h @ p["w2"] + p["b2"]


if __name__ == "__main__":
    key = jax.random.PRNGKey(0)
    k_x, k_p = jax.random.split(key)

    B = 8
    x = jax.random.normal(k_x, (B, D_IN), jnp.float32)
    params = init_params(k_p)
    folded = fold_and_pad_params(params)

    out_slab = mlp_forward(x, folded)
    out_slab = jax.block_until_ready(out_slab)
    out = np.asarray(out_slab)[:, :D_OUT]        # consumer-side index into the slab

    ref = mlp_reference(x, params)
    # bf16 MXU operands with f32 accumulation -> a few-1e-3 abs error is expected.
    np.testing.assert_allclose(out, np.asarray(ref), rtol=2e-2, atol=2e-2)

    assert out.shape == (B, D_OUT)
    print("KERNEL_OK")
</pallas_src>

<mosaic_0001>
module attributes {stable_mosaic.version = 11 : i64} {
  func.func @mlp_kernel(%arg0: i32, %arg1: memref<8x768xf32, #tpu.memory_space<vmem>>, %arg2: memref<768x512xbf16, #tpu.memory_space<vmem>>, %arg3: memref<1x512xf32, #tpu.memory_space<vmem>>, %arg4: memref<512x384xbf16, #tpu.memory_space<vmem>>, %arg5: memref<1x384xf32, #tpu.memory_space<vmem>>, %arg6: memref<8x384xf32, #tpu.memory_space<vmem>>) attributes {dimension_semantics = [#tpu.dimension_semantics<parallel>], iteration_bounds = array<i64: 1>, scalar_prefetch = 0 : i64, scratch_operands = 0 : i64, tpu.core_type = #tpu.core_type<tc>, window_params = [{transform_indices = @transform_0, window_bounds = array<i64: 8, 768>}, {pipeline_mode = #tpu.pipeline_mode<synchronous>, transform_indices = @transform_1, window_bounds = array<i64: 768, 512>}, {pipeline_mode = #tpu.pipeline_mode<synchronous>, transform_indices = @transform_2, window_bounds = array<i64: 1, 512>}, {pipeline_mode = #tpu.pipeline_mode<synchronous>, transform_indices = @transform_3, window_bounds = array<i64: 512, 384>}, {pipeline_mode = #tpu.pipeline_mode<synchronous>, transform_indices = @transform_4, window_bounds = array<i64: 1, 384>}, {transform_indices = @transform_5, window_bounds = array<i64: 8, 384>}]} {
    %c0 = arith.constant 0 : index
    %c0_0 = arith.constant 0 : index
    %0 = vector.load %arg1[%c0, %c0_0] : memref<8x768xf32, #tpu.memory_space<vmem>>, vector<8x768xf32>
    %1 = arith.truncf %0 : vector<8x768xf32> to vector<8x768xbf16>
    %c0_1 = arith.constant 0 : index
    %c0_2 = arith.constant 0 : index
    %2 = vector.load %arg2[%c0_1, %c0_2] : memref<768x512xbf16, #tpu.memory_space<vmem>>, vector<768x512xbf16>
    %cst = arith.constant dense<0.000000e+00> : vector<8x512xf32>
    %3 = tpu.matmul %1, %2, %cst {dimension_numbers = #tpu.dot_dimension_numbers<[1], [0], [0], [1], [0, 0, 1, 1], [], []>} : vector<8x768xbf16>, vector<768x512xbf16>, vector<8x512xf32> -> vector<8x512xf32>
    %c0_3 = arith.constant 0 : index
    %c0_4 = arith.constant 0 : index
    %4 = vector.load %arg3[%c0_3, %c0_4] : memref<1x512xf32, #tpu.memory_space<vmem>>, vector<1x512xf32>
    %5 = vector.broadcast %4 : vector<1x512xf32> to vector<8x512xf32>
    %6 = arith.addf %3, %5 : vector<8x512xf32>
    %cst_5 = arith.constant 0.000000e+00 : f32
    %7 = vector.broadcast %cst_5 : f32 to vector<8x512xf32>
    %8 = arith.maximumf %6, %7 : vector<8x512xf32>
    %9 = arith.truncf %8 : vector<8x512xf32> to vector<8x512xbf16>
    %c0_6 = arith.constant 0 : index
    %c0_7 = arith.constant 0 : index
    %10 = vector.load %arg4[%c0_6, %c0_7] : memref<512x384xbf16, #tpu.memory_space<vmem>>, vector<512x384xbf16>
    %cst_8 = arith.constant dense<0.000000e+00> : vector<8x384xf32>
    %11 = tpu.matmul %9, %10, %cst_8 {dimension_numbers = #tpu.dot_dimension_numbers<[1], [0], [0], [1], [0, 0, 1, 1], [], []>} : vector<8x512xbf16>, vector<512x384xbf16>, vector<8x384xf32> -> vector<8x384xf32>
    %c0_9 = arith.constant 0 : index
    %c0_10 = arith.constant 0 : index
    %12 = vector.load %arg5[%c0_9, %c0_10] : memref<1x384xf32, #tpu.memory_space<vmem>>, vector<1x384xf32>
    %13 = vector.broadcast %12 : vector<1x384xf32> to vector<8x384xf32>
    %14 = arith.addf %11, %13 : vector<8x384xf32>
    %c0_11 = arith.constant 0 : index
    %c0_12 = arith.constant 0 : index
    %15 = vector.load %arg6[%c0_11, %c0_12] : memref<8x384xf32, #tpu.memory_space<vmem>>, vector<8x384xf32>
    tpu.vector_store %arg6[%c0_11, %c0_12], %14 {strides = array<i32>} : memref<8x384xf32, #tpu.memory_space<vmem>>, vector<8x384xf32>,
    return
  }
  func.func @transform_0(%arg0: i32) -> (i32, i32) {
    %c0_i32 = arith.constant 0 : i32
    %c0_i32_0 = arith.constant 0 : i32
    return %arg0, %c0_i32 : i32, i32
  }
  func.func @transform_1(%arg0: i32) -> (i32, i32) {
    %c0_i32 = arith.constant 0 : i32
    %c0_i32_0 = arith.constant 0 : i32
    %c0_i32_1 = arith.constant 0 : i32
    return %c0_i32, %c0_i32_0 : i32, i32
  }
  func.func @transform_2(%arg0: i32) -> (i32, i32) {
    %c0_i32 = arith.constant 0 : i32
    %c0_i32_0 = arith.constant 0 : i32
    %c0_i32_1 = arith.constant 0 : i32
    return %c0_i32, %c0_i32_0 : i32, i32
  }
  func.func @transform_3(%arg0: i32) -> (i32, i32) {
    %c0_i32 = arith.constant 0 : i32
    %c0_i32_0 = arith.constant 0 : i32
    %c0_i32_1 = arith.constant 0 : i32
    return %c0_i32, %c0_i32_0 : i32, i32
  }
  func.func @transform_4(%arg0: i32) -> (i32, i32) {
    %c0_i32 = arith.constant 0 : i32
    %c0_i32_0 = arith.constant 0 : i32
    %c0_i32_1 = arith.constant 0 : i32
    return %c0_i32, %c0_i32_0 : i32, i32
  }
  func.func @transform_5(%arg0: i32) -> (i32, i32) {
    %c0_i32 = arith.constant 0 : i32
    %c0_i32_0 = arith.constant 0 : i32
    return %arg0, %c0_i32 : i32, i32
  }
}

</mosaic_0001>

<llo_original>
// kernel: tpu_custom_call.1
$region0: #{tpu_custom_call.1}
  #allocation0 [shape = 'u32[]', space=smem, size = 0x4, offset = 0x4, fixed_abs, tag = 'smem constant byte address 0x4 - core index']
  #allocation1 [shape = 'u32[144,128]{1,0:T(1,128)}', space=vmem, size = 0x12000, scoped, tag = 'internal scratch']
  %s0 = inlined_call_operand.hbm [shape: f32[8,768], index: 0, kind: input, shape index: {}]
  %s1 = inlined_call_operand.hbm [shape: bf16[768,512], index: 1, kind: input, shape index: {}]
  %s2 = inlined_call_operand.hbm [shape: f32[1,512], index: 2, kind: input, shape index: {}]
  %s3 = inlined_call_operand.hbm [shape: bf16[512,384], index: 3, kind: input, shape index: {}]
  %s4 = inlined_call_operand.vmem [shape: f32[1,384], index: 4, kind: input, shape index: {}]
  %s5 = inlined_call_operand.hbm [shape: f32[8,384], index: 5, kind: output, shape index: {}]
  %s6 = sld [smem:[#allocation0]]
  $region46: #{tpu_custom_call.1} parent=0
    _
  %s8 = ssub.s32 1, %s6
  %s9 = scalar_select 0, %s8, %s6
  $region1: #{tpu_custom_call.1} parent=0
    #allocation2 [shape = 'u8[24576]{0}', space=vmem, size = 0x6000, scoped, tag = 'input window, operand 0, single buffered']
    #allocation3 [shape = 's32[1]{0}', space=sflag, size = 0x4, scoped, tag = 'scoped memory for tpu_custom_call.1']
    #allocation4 [shape = 's32[1]{0}', space=sflag, size = 0x4, scoped, tag = 'scoped memory for tpu_custom_call.1']
    #allocation5 [shape = 'u8[786432]{0}', space=vmem, size = 0xc0000, scoped, tag = 'input window, operand 1, single buffered']
    #allocation6 [shape = 's32[1]{0}', space=sflag, size = 0x4, scoped, tag = 'scoped memory for tpu_custom_call.1']
    #allocation7 [shape = 'u8[2048]{0}', space=vmem, size = 0x800, scoped, tag = 'input window, operand 2, single buffered']
    #allocation8 [shape = 'u8[393216]{0}', space=vmem, size = 0x60000, scoped, tag = 'input window, operand 3, single buffered']
    #allocation9 [shape = 's32[1]{0}', space=sflag, size = 0x4, scoped, tag = 'scoped memory for tpu_custom_call.1']
    #allocation10 [shape = 'u8[12288]{0}', space=vmem, size = 0x3000, scoped, tag = 'output window, operand 0, single buffered']
    %10 = vsyncpa [#allocation3], 0
    %11 = vsyncpa [#allocation6], 0
    %12 = vsyncpa [#allocation9], 0
    %13 = vsyncpa [#allocation4], 0
    // Predicated region
    $region2: #{tpu_custom_call.1} parent=1 // pred_check
      _
    $region3: #{tpu_custom_call.1} parent=1 // pred_check_branch
      %15 = sbr.rel (0) target = $region5
    $region4: #{tpu_custom_call.1} parent=1 // pred_region
      %s17 = ssub.s32 768, 768
      %18 = vsyncadd [#allocation3], %s17
      %s20 = sshll.u32 [#allocation2], 4
      %s21 = int_to_ptr.vmem [resolvable:$true] %s20
      %23 = dma.hbm_to_vmem [thread:$0]  %s0, 768, %s21, [#allocation3]
    $region5: #{tpu_custom_call.1} parent=1 // pred_fallthru
      _
    // Predicated region
    $region6: #{tpu_custom_call.1} parent=1 // pred_check
      _
    $region7: #{tpu_custom_call.1} parent=1 // pred_check_branch
      %25 = sbr.rel (0) target = $region9
    $region8: #{tpu_custom_call.1} parent=1 // pred_region
      %s27 = ssub.s32 24576, 24576
      %28 = vsyncadd [#allocation6], %s27
      %s29 = sshll.u32 [#allocation5], 4
      %s30 = int_to_ptr.vmem [resolvable:$true] %s29
      %35 = dma.hbm_to_vmem [thread:$0]  %s1, 24576, %s30, [#allocation6], 256, 256, 16
    $region9: #{tpu_custom_call.1} parent=1 // pred_fallthru
      _
    // Predicated region
    $region10: #{tpu_custom_call.1} parent=1 // pred_check
      _
    $region11: #{tpu_custom_call.1} parent=1 // pred_check_branch
      %37 = sbr.rel (0) target = $region13
    $region12: #{tpu_custom_call.1} parent=1 // pred_region
      %s39 = ssub.s32 64, 64
      %40 = vsyncadd [#allocation6], %s39
      %s42 = sshll.u32 [#allocation7], 4
      %s43 = int_to_ptr.vmem [resolvable:$true] %s42
      %45 = dma.hbm_to_vmem [thread:$0]  %s2, 64, %s43, [#allocation6]
    $region13: #{tpu_custom_call.1} parent=1 // pred_fallthru
      _
    // Predicated region
    $region14: #{tpu_custom_call.1} parent=1 // pred_check
      _
    $region15: #{tpu_custom_call.1} parent=1 // pred_check_branch
      %47 = sbr.rel (0) target = $region17
    $region16: #{tpu_custom_call.1} parent=1 // pred_region
      %s49 = ssub.s32 12288, 12288
      %50 = vsyncadd [#allocation9], %s49
      %s51 = sshll.u32 [#allocation8], 4
      %s52 = int_to_ptr.vmem [resolvable:$true] %s51
      %57 = dma.hbm_to_vmem [thread:$0]  %s3, 12288, %s52, [#allocation9], 192, 192, 12
    $region17: #{tpu_custom_call.1} parent=1 // pred_fallthru
      _
    // Predicated region
    $region18: #{tpu_custom_call.1} parent=1 // pred_check
      _
    $region19: #{tpu_custom_call.1} parent=1 // pred_check_branch
      %59 = sbr.rel (0) target = $region21
    $region20: #{tpu_custom_call.1} parent=1 // pred_region
      _
    $region21: #{tpu_custom_call.1} parent=1 // pred_fallthru
      _
    // Predicated region
    $region22: #{tpu_custom_call.1} parent=1 // pred_check
      _
    $region23: #{tpu_custom_call.1} parent=1 // pred_check_branch
      %61 = sbr.rel (0) target = $region25
    $region24: #{tpu_custom_call.1} parent=1 // pred_region
      %62 = dma.done [#allocation3], 768
    $region25: #{tpu_custom_call.1} parent=1 // pred_fallthru
      _
    // Predicated region
    $region26: #{tpu_custom_call.1} parent=1 // pred_check
      _
    $region27: #{tpu_custom_call.1} parent=1 // pred_check_branch
      %64 = sbr.rel (0) target = $region29
    $region28: #{tpu_custom_call.1} parent=1 // pred_region
      %65 = dma.done [#allocation6], 24576
    $region29: #{tpu_custom_call.1} parent=1 // pred_fallthru
      _
    // Predicated region
    $region30: #{tpu_custom_call.1} parent=1 // pred_check
      _
    $region31: #{tpu_custom_call.1} parent=1 // pred_check_branch
      %67 = sbr.rel (0) target = $region33
    $region32: #{tpu_custom_call.1} parent=1 // pred_region
      %68 = dma.done [#allocation6], 64
    $region33: #{tpu_custom_call.1} parent=1 // pred_fallthru
      _
    // Predicated region
    $region34: #{tpu_custom_call.1} parent=1 // pred_check
      _
    $region35: #{tpu_custom_call.1} parent=1 // pred_check_branch
      %70 = sbr.rel (0) target = $region37
    $region36: #{tpu_custom_call.1} parent=1 // pred_region
      %71 = dma.done [#allocation9], 12288
    $region37: #{tpu_custom_call.1} parent=1 // pred_fallthru
      _
    %v73 = vld [vmem:[#allocation2] sm:$0xff]
    %v74 = vld [vmem:[#allocation2 + $0x8] sm:$0xff]
    %v75 = vld [vmem:[#allocation2 + $0x10] sm:$0xff]
    %v76 = vld [vmem:[#allocation2 + $0x18] sm:$0xff]
    %v77 = vld [vmem:[#allocation2 + $0x20] sm:$0xff]
    %v78 = vld [vmem:[#allocation2 + $0x28] sm:$0xff]
    %v79 = vpack.c.bf16 %v73, %v73
    %v80 = vpack.c.bf16 %v74, %v74
    %v81 = vpack.c.bf16 %v75, %v75
    %v82 = vpack.c.bf16 %v76, %v76
    %v83 = vpack.c.bf16 %v77, %v77
    %v84 = vpack.c.bf16 %v78, %v78
    %v85 = vld [vmem:[#allocation5] sm:$0xff]
    %v86 = vld [vmem:[#allocation5 + $0x8] sm:$0xff]
    %v87 = vld [vmem:[#allocation5 + $0x10] sm:$0xff]
    %v88 = vld [vmem:[#allocation5 + $0x18] sm:$0xff]
    %v89 = vld [vmem:[#allocation5 + $0x20] sm:$0xff]
    %v90 = vld [vmem:[#allocation5 + $0x28] sm:$0xff]
    %v91 = vld [vmem:[#allocation5 + $0x30] sm:$0xff]
    %v92 = vld [vmem:[#allocation5 + $0x38] sm:$0xff]
    %v93 = vld [vmem:[#allocation5 + $0x40] sm:$0xff]
    %v94 = vld [vmem:[#allocation5 + $0x48] sm:$0xff]
    %v95 = vld [vmem:[#allocation5 + $0x50] sm:$0xff]
    %v96 = vld [vmem:[#allocation5 + $0x58] sm:$0xff]
    %v97 = vld [vmem:[#allocation5 + $0x60] sm:$0xff]
    %v98 = vld [vmem:[#allocation5 + $0x68] sm:$0xff]
    %v99 = vld [vmem:[#allocation5 + $0x70] sm:$0xff]
    %v100 = vld [vmem:[#allocation5 + $0x78] sm:$0xff]
    %v101 = vld [vmem:[#allocation5 + $0x80] sm:$0xff]
    %v102 = vld [vmem:[#allocation5 + $0x88] sm:$0xff]
    %v103 = vld [vmem:[#allocation5 + $0x90] sm:$0xff]
    %v104 = vld [vmem:[#allocation5 + $0x98] sm:$0xff]
    %v105 = vld [vmem:[#allocation5 + $0xa0] sm:$0xff]
    %v106 = vld [vmem:[#allocation5 + $0xa8] sm:$0xff]
    %v107 = vld [vmem:[#allocation5 + $0xb0] sm:$0xff]
    %v108 = vld [vmem:[#allocation5 + $0xb8] sm:$0xff]
    %v109 = vld [vmem:[#allocation5 + $0xc0] sm:$0xff]
    %v110 = vld [vmem:[#allocation5 + $0xc8] sm:$0xff]
    %v111 = vld [vmem:[#allocation5 + $0xd0] sm:$0xff]
    %v112 = vld [vmem:[#allocation5 + $0xd8] sm:$0xff]
    %v113 = vld [vmem:[#allocation5 + $0xe0] sm:$0xff]
    %v114 = vld [vmem:[#allocation5 + $0xe8] sm:$0xff]
    %v115 = vld [vmem:[#allocation5 + $0xf0] sm:$0xff]
    %v116 = vld [vmem:[#allocation5 + $0xf8] sm:$0xff]
    %v117 = vld [vmem:[#allocation5 + $0x100] sm:$0xff]
    %v118 = vld [vmem:[#allocation5 + $0x108] sm:$0xff]
    %v119 = vld [vmem:[#allocation5 + $0x110] sm:$0xff]
    %v120 = vld [vmem:[#allocation5 + $0x118] sm:$0xff]
    %v121 = vld [vmem:[#allocation5 + $0x120] sm:$0xff]
    %v122 = vld [vmem:[#allocation5 + $0x128] sm:$0xff]
    %v123 = vld [vmem:[#allocation5 + $0x130] sm:$0xff]
    %v124 = vld [vmem:[#allocation5 + $0x138] sm:$0xff]
    %v125 = vld [vmem:[#allocation5 + $0x140] sm:$0xff]
    %v126 = vld [vmem:[#allocation5 + $0x148] sm:$0xff]
    %v127 = vld [vmem:[#allocation5 + $0x150] sm:$0xff]
    %v128 = vld [vmem:[#allocation5 + $0x158] sm:$0xff]
    %v129 = vld [vmem:[#allocation5 + $0x160] sm:$0xff]
    %v130 = vld [vmem:[#allocation5 + $0x168] sm:$0xff]
    %v131 = vld [vmem:[#allocation5 + $0x170] sm:$0xff]
    %v132 = vld [vmem:[#allocation5 + $0x178] sm:$0xff]
    %v133 = vld [vmem:[#allocation5 + $0x180] sm:$0xff]
    %v134 = vld [vmem:[#allocation5 + $0x188] sm:$0xff]
    %v135 = vld [vmem:[#allocation5 + $0x190] sm:$0xff]
    %v136 = vld [vmem:[#allocation5 + $0x198] sm:$0xff]
    %v137 = vld [vmem:[#allocation5 + $0x1a0] sm:$0xff]
    %v138 = vld [vmem:[#allocation5 + $0x1a8] sm:$0xff]
    %v139 = vld [vmem:[#allocation5 + $0x1b0] sm:$0xff]
    %v140 = vld [vmem:[#allocation5 + $0x1b8] sm:$0xff]
    %v141 = vld [vmem:[#allocation5 + $0x1c0] sm:$0xff]
    %v142 = vld [vmem:[#allocation5 + $0x1c8] sm:$0xff]
    %v143 = vld [vmem:[#allocation5 + $0x1d0] sm:$0xff]
    %v144 = vld [vmem:[#allocation5 + $0x1d8] sm:$0xff]
    %v145 = vld [vmem:[#allocation5 + $0x1e0] sm:$0xff]
    %v146 = vld [vmem:[#allocation5 + $0x1e8] sm:$0xff]
    %v147 = vld [vmem:[#allocation5 + $0x1f0] sm:$0xff]
    %v148 = vld [vmem:[#allocation5 + $0x1f8] sm:$0xff]
    %v149 = vld [vmem:[#allocation5 + $0x200] sm:$0xff]
    %v150 = vld [vmem:[#allocation5 + $0x208] sm:$0xff]
    %v151 = vld [vmem:[#allocation5 + $0x210] sm:$0xff]
    %v152 = vld [vmem:[#allocation5 + $0x218] sm:$0xff]
    %v153 = vld [vmem:[#allocation5 + $0x220] sm:$0xff]
    %v154 = vld [vmem:[#allocation5 + $0x228] sm:$0xff]
    %v155 = vld [vmem:[#allocation5 + $0x230] sm:$0xff]
    %v156 = vld [vmem:[#allocation5 + $0x238] sm:$0xff]
    %v157 = vld [vmem:[#allocation5 + $0x240] sm:$0xff]
    %v158 = vld [vmem:[#allocation5 + $0x248] sm:$0xff]
    %v159 = vld [vmem:[#allocation5 + $0x250] sm:$0xff]
    %v160 = vld [vmem:[#allocation5 + $0x258] sm:$0xff]
    %v161 = vld [vmem:[#allocation5 + $0x260] sm:$0xff]
    %v162 = vld [vmem:[#allocation5 + $0x268] sm:$0xff]
    %v163 = vld [vmem:[#allocation5 + $0x270] sm:$0xff]
    %v164 = vld [vmem:[#allocation5 + $0x278] sm:$0xff]
    %v165 = vld [vmem:[#allocation5 + $0x280] sm:$0xff]
    %v166 = vld [vmem:[#allocation5 + $0x288] sm:$0xff]
    %v167 = vld [vmem:[#allocation5 + $0x290] sm:$0xff]
    %v168 = vld [vmem:[#allocation5 + $0x298] sm:$0xff]
    %v169 = vld [vmem:[#allocation5 + $0x2a0] sm:$0xff]
    %v170 = vld [vmem:[#allocation5 + $0x2a8] sm:$0xff]
    %v171 = vld [vmem:[#allocation5 + $0x2b0] sm:$0xff]
    %v172 = vld [vmem:[#allocation5 + $0x2b8] sm:$0xff]
    %v173 = vld [vmem:[#allocation5 + $0x2c0] sm:$0xff]
    %v174 = vld [vmem:[#allocation5 + $0x2c8] sm:$0xff]
    %v175 = vld [vmem:[#allocation5 + $0x2d0] sm:$0xff]
    %v176 = vld [vmem:[#allocation5 + $0x2d8] sm:$0xff]
    %v177 = vld [vmem:[#allocation5 + $0x2e0] sm:$0xff]
    %v178 = vld [vmem:[#allocation5 + $0x2e8] sm:$0xff]
    %v179 = vld [vmem:[#allocation5 + $0x2f0] sm:$0xff]
    %v180 = vld [vmem:[#allocation5 + $0x2f8] sm:$0xff]
    %v181 = vld [vmem:[#allocation5 + $0x300] sm:$0xff]
    %v182 = vld [vmem:[#allocation5 + $0x308] sm:$0xff]
    %v183 = vld [vmem:[#allocation5 + $0x310] sm:$0xff]
    %v184 = vld [vmem:[#allocation5 + $0x318] sm:$0xff]
    %v185 = vld [vmem:[#allocation5 + $0x320] sm:$0xff]
    %v186 = vld [vmem:[#allocation5 + $0x328] sm:$0xff]
    %v187 = vld [vmem:[#allocation5 + $0x330] sm:$0xff]
    %v188 = vld [vmem:[#allocation5 + $0x338] sm:$0xff]
    %v189 = vld [vmem:[#allocation5 + $0x340] sm:$0xff]
    %v190 = vld [vmem:[#allocation5 + $0x348] sm:$0xff]
    %v191 = vld [vmem:[#allocation5 + $0x350] sm:$0xff]
    %v192 = vld [vmem:[#allocation5 + $0x358] sm:$0xff]
    %v193 = vld [vmem:[#allocation5 + $0x360] sm:$0xff]
    %v194 = vld [vmem:[#allocation5 + $0x368] sm:$0xff]
    %v195 = vld [vmem:[#allocation5 + $0x370] sm:$0xff]
    %v196 = vld [vmem:[#allocation5 + $0x378] sm:$0xff]
    %v197 = vld [vmem:[#allocation5 + $0x380] sm:$0xff]
    %v198 = vld [vmem:[#allocation5 + $0x388] sm:$0xff]
    %v199 = vld [vmem:[#allocation5 + $0x390] sm:$0xff]
    %v200 = vld [vmem:[#allocation5 + $0x398] sm:$0xff]
    %v201 = vld [vmem:[#allocation5 + $0x3a0] sm:$0xff]
    %v202 = vld [vmem:[#allocation5 + $0x3a8] sm:$0xff]
    %v203 = vld [vmem:[#allocation5 + $0x3b0] sm:$0xff]
    %v204 = vld [vmem:[#allocation5 + $0x3b8] sm:$0xff]
    %v205 = vld [vmem:[#allocation5 + $0x3c0] sm:$0xff]
    %v206 = vld [vmem:[#allocation5 + $0x3c8] sm:$0xff]
    %v207 = vld [vmem:[#allocation5 + $0x3d0] sm:$0xff]
    %v208 = vld [vmem:[#allocation5 + $0x3d8] sm:$0xff]
    %v209 = vld [vmem:[#allocation5 + $0x3e0] sm:$0xff]
    %v210 = vld [vmem:[#allocation5 + $0x3e8] sm:$0xff]
    %v211 = vld [vmem:[#allocation5 + $0x3f0] sm:$0xff]
    %v212 = vld [vmem:[#allocation5 + $0x3f8] sm:$0xff]
    %v213 = vld [vmem:[#allocation5 + $0x400] sm:$0xff]
    %v214 = vld [vmem:[#allocation5 + $0x408] sm:$0xff]
    %v215 = vld [vmem:[#allocation5 + $0x410] sm:$0xff]
    %v216 = vld [vmem:[#allocation5 + $0x418] sm:$0xff]
    %v217 = vld [vmem:[#allocation5 + $0x420] sm:$0xff]
    %v218 = vld [vmem:[#allocation5 + $0x428] sm:$0xff]
    %v219 = vld [vmem:[#allocation5 + $0x430] sm:$0xff]
    %v220 = vld [vmem:[#allocation5 + $0x438] sm:$0xff]
    %v221 = vld [vmem:[#allocation5 + $0x440] sm:$0xff]
    %v222 = vld [vmem:[#allocation5 + $0x448] sm:$0xff]
    %v223 = vld [vmem:[#allocation5 + $0x450] sm:$0xff]
    %v224 = vld [vmem:[#allocation5 + $0x458] sm:$0xff]
    %v225 = vld [vmem:[#allocation5 + $0x460] sm:$0xff]
    %v226 = vld [vmem:[#allocation5 + $0x468] sm:$0xff]
    %v227 = vld [vmem:[#allocation5 + $0x470] sm:$0xff]
    %v228 = vld [vmem:[#allocation5 + $0x478] sm:$0xff]
    %v229 = vld [vmem:[#allocation5 + $0x480] sm:$0xff]
    %v230 = vld [vmem:[#allocation5 + $0x488] sm:$0xff]
    %v231 = vld [vmem:[#allocation5 + $0x490] sm:$0xff]
    %v232 = vld [vmem:[#allocation5 + $0x498] sm:$0xff]
    %v233 = vld [vmem:[#allocation5 + $0x4a0] sm:$0xff]
    %v234 = vld [vmem:[#allocation5 + $0x4a8] sm:$0xff]
    %v235 = vld [vmem:[#allocation5 + $0x4b0] sm:$0xff]
    %v236 = vld [vmem:[#allocation5 + $0x4b8] sm:$0xff]
    %v237 = vld [vmem:[#allocation5 + $0x4c0] sm:$0xff]
    %v238 = vld [vmem:[#allocation5 + $0x4c8] sm:$0xff]
    %v239 = vld [vmem:[#allocation5 + $0x4d0] sm:$0xff]
    %v240 = vld [vmem:[#allocation5 + $0x4d8] sm:$0xff]
    %v241 = vld [vmem:[#allocation5 + $0x4e0] sm:$0xff]
    %v242 = vld [vmem:[#allocation5 + $0x4e8] sm:$0xff]
    %v243 = vld [vmem:[#allocation5 + $0x4f0] sm:$0xff]
    %v244 = vld [vmem:[#allocation5 + $0x4f8] sm:$0xff]
    %v245 = vld [vmem:[#allocation5 + $0x500] sm:$0xff]
    %v246 = vld [vmem:[#allocation5 + $0x508] sm:$0xff]
    %v247 = vld [vmem:[#allocation5 + $0x510] sm:$0xff]
    %v248 = vld [vmem:[#allocation5 + $0x518] sm:$0xff]
    %v249 = vld [vmem:[#allocation5 + $0x520] sm:$0xff]
    %v250 = vld [vmem:[#allocation5 + $0x528] sm:$0xff]
    %v251 = vld [vmem:[#allocation5 + $0x530] sm:$0xff]
    %v252 = vld [vmem:[#allocation5 + $0x538] sm:$0xff]
    %v253 = vld [vmem:[#allocation5 + $0x540] sm:$0xff]
    %v254 = vld [vmem:[#allocation5 + $0x548] sm:$0xff]
    %v255 = vld [vmem:[#allocation5 + $0x550] sm:$0xff]
    %v256 = vld [vmem:[#allocation5 + $0x558] sm:$0xff]
    %v257 = vld [vmem:[#allocation5 + $0x560] sm:$0xff]
    %v258 = vld [vmem:[#allocation5 + $0x568] sm:$0xff]
    %v259 = vld [vmem:[#allocation5 + $0x570] sm:$0xff]
    %v260 = vld [vmem:[#allocation5 + $0x578] sm:$0xff]
    %v261 = vld [vmem:[#allocation5 + $0x580] sm:$0xff]
    %v262 = vld [vmem:[#allocation5 + $0x588] sm:$0xff]
    %v263 = vld [vmem:[#allocation5 + $0x590] sm:$0xff]
    %v264 = vld [vmem:[#allocation5 + $0x598] sm:$0xff]
    %v265 = vld [vmem:[#allocation5 + $0x5a0] sm:$0xff]
    %v266 = vld [vmem:[#allocation5 + $0x5a8] sm:$0xff]
    %v267 = vld [vmem:[#allocation5 + $0x5b0] sm:$0xff]
    %v268 = vld [vmem:[#allocation5 + $0x5b8] sm:$0xff]
    %v269 = vld [vmem:[#allocation5 + $0x5c0] sm:$0xff]
    %v270 = vld [vmem:[#allocation5 + $0x5c8] sm:$0xff]
    %v271 = vld [vmem:[#allocation5 + $0x5d0] sm:$0xff]
    %v272 = vld [vmem:[#allocation5 + $0x5d8] sm:$0xff]
    %v273 = vld [vmem:[#allocation5 + $0x5e0] sm:$0xff]
    %v274 = vld [vmem:[#allocation5 + $0x5e8] sm:$0xff]
    %v275 = vld [vmem:[#allocation5 + $0x5f0] sm:$0xff]
    %v276 = vld [vmem:[#allocation5 + $0x5f8] sm:$0xff]
    %v277 = vld [vmem:[#allocation7] sm:$0xf]
    %v279 = vlaneseq
    %v280 = vshrl.u32 %v279, 7
    %v281 = vsub.s32 0, %v280
    %v282 = vrot.slane %v277, %v281
    %v283 = vlaneseq
    %v284 = vshrl.u32 %v283, 7
    %v285 = vsub.s32 1, %v284
    %v286 = vrot.slane %v277, %v285
    %v287 = vlaneseq
    %v288 = vshrl.u32 %v287, 7
    %v289 = vsub.s32 2, %v288
    %v290 = vrot.slane %v277, %v289
    %v291 = vlaneseq
    %v292 = vshrl.u32 %v291, 7
    %v293 = vsub.s32 3, %v292
    %v294 = vrot.slane %v277, %v293
    %v491 = vunpack.c.l.b16 %v85
    %v492 = vunpack.c.h.b16 %v85
    %v493 = vunpack.c.l.b16 %v86
    %v494 = vunpack.c.h.b16 %v86
    %v495 = vunpack.c.l.b16 %v87
    %v496 = vunpack.c.h.b16 %v87
    %v497 = vunpack.c.l.b16 %v88
    %v498 = vunpack.c.h.b16 %v88
    %v499 = vunpack.c.l.b16 %v89
    %v500 = vunpack.c.h.b16 %v89
    %v501 = vunpack.c.l.b16 %v90
    %v502 = vunpack.c.h.b16 %v90
    %v503 = vunpack.c.l.b16 %v91
    %v504 = vunpack.c.h.b16 %v91
    %v505 = vunpack.c.l.b16 %v92
    %v506 = vunpack.c.h.b16 %v92
    %v507 = vunpack.c.l.b16 %v93
    %v508 = vunpack.c.h.b16 %v93
    %v509 = vunpack.c.l.b16 %v94
    %v510 = vunpack.c.h.b16 %v94
    %v511 = vunpack.c.l.b16 %v95
    %v512 = vunpack.c.h.b16 %v95
    %v513 = vunpack.c.l.b16 %v96
    %v514 = vunpack.c.h.b16 %v96
    %v515 = vunpack.c.l.b16 %v97
    %v516 = vunpack.c.h.b16 %v97
    %v517 = vunpack.c.l.b16 %v98
    %v518 = vunpack.c.h.b16 %v98
    %v519 = vunpack.c.l.b16 %v99
    %v520 = vunpack.c.h.b16 %v99
    %v521 = vunpack.c.l.b16 %v100
    %v522 = vunpack.c.h.b16 %v100
    %v523 = vunpack.c.l.b16 %v101
    %v524 = vunpack.c.h.b16 %v101
    %v525 = vunpack.c.l.b16 %v102
    %v526 = vunpack.c.h.b16 %v102
    %v527 = vunpack.c.l.b16 %v103
    %v528 = vunpack.c.h.b16 %v103
    %v529 = vunpack.c.l.b16 %v104
    %v530 = vunpack.c.h.b16 %v104
    %v531 = vunpack.c.l.b16 %v105
    %v532 = vunpack.c.h.b16 %v105
    %v533 = vunpack.c.l.b16 %v106
    %v534 = vunpack.c.h.b16 %v106
    %v535 = vunpack.c.l.b16 %v107
    %v536 = vunpack.c.h.b16 %v107
    %v537 = vunpack.c.l.b16 %v108
    %v538 = vunpack.c.h.b16 %v108
    %v539 = vunpack.c.l.b16 %v109
    %v540 = vunpack.c.h.b16 %v109
    %v541 = vunpack.c.l.b16 %v110
    %v542 = vunpack.c.h.b16 %v110
    %v543 = vunpack.c.l.b16 %v111
    %v544 = vunpack.c.h.b16 %v111
    %v545 = vunpack.c.l.b16 %v112
    %v546 = vunpack.c.h.b16 %v112
    %v547 = vunpack.c.l.b16 %v113
    %v548 = vunpack.c.h.b16 %v113
    %v549 = vunpack.c.l.b16 %v114
    %v550 = vunpack.c.h.b16 %v114
    %v551 = vunpack.c.l.b16 %v115
    %v552 = vunpack.c.h.b16 %v115
    %v553 = vunpack.c.l.b16 %v116
    %v554 = vunpack.c.h.b16 %v116
    %v555 = vunpack.c.l.b16 %v117
    %v556 = vunpack.c.h.b16 %v117
    %v557 = vunpack.c.l.b16 %v118
    %v558 = vunpack.c.h.b16 %v118
    %v559 = vunpack.c.l.b16 %v119
    %v560 = vunpack.c.h.b16 %v119
    %v561 = vunpack.c.l.b16 %v120
    %v562 = vunpack.c.h.b16 %v120
    %v563 = vunpack.c.l.b16 %v121
    %v564 = vunpack.c.h.b16 %v121
    %v565 = vunpack.c.l.b16 %v122
    %v566 = vunpack.c.h.b16 %v122
    %v567 = vunpack.c.l.b16 %v123
    %v568 = vunpack.c.h.b16 %v123
    %v569 = vunpack.c.l.b16 %v124
    %v570 = vunpack.c.h.b16 %v124
    %v571 = vunpack.c.l.b16 %v125
    %v572 = vunpack.c.h.b16 %v125
    %v573 = vunpack.c.l.b16 %v126
    %v574 = vunpack.c.h.b16 %v126
    %v575 = vunpack.c.l.b16 %v127
    %v576 = vunpack.c.h.b16 %v127
    %v577 = vunpack.c.l.b16 %v128
    %v578 = vunpack.c.h.b16 %v128
    %v579 = vunpack.c.l.b16 %v129
    %v580 = vunpack.c.h.b16 %v129
    %v581 = vunpack.c.l.b16 %v130
    %v582 = vunpack.c.h.b16 %v130
    %v583 = vunpack.c.l.b16 %v131
    %v584 = vunpack.c.h.b16 %v131
    %v585 = vunpack.c.l.b16 %v132
    %v586 = vunpack.c.h.b16 %v132
    %v587 = vunpack.c.l.b16 %v133
    %v588 = vunpack.c.h.b16 %v133
    %v589 = vunpack.c.l.b16 %v134
    %v590 = vunpack.c.h.b16 %v134
    %v591 = vunpack.c.l.b16 %v135
    %v592 = vunpack.c.h.b16 %v135
    %v593 = vunpack.c.l.b16 %v136
    %v594 = vunpack.c.h.b16 %v136
    %v595 = vunpack.c.l.b16 %v137
    %v596 = vunpack.c.h.b16 %v137
    %v597 = vunpack.c.l.b16 %v138
    %v598 = vunpack.c.h.b16 %v138
    %v599 = vunpack.c.l.b16 %v139
    %v600 = vunpack.c.h.b16 %v139
    %v601 = vunpack.c.l.b16 %v140
    %v602 = vunpack.c.h.b16 %v140
    %v603 = vunpack.c.l.b16 %v141
    %v604 = vunpack.c.h.b16 %v141
    %v605 = vunpack.c.l.b16 %v142
    %v606 = vunpack.c.h.b16 %v142
    %v607 = vunpack.c.l.b16 %v143
    %v608 = vunpack.c.h.b16 %v143
    %v609 = vunpack.c.l.b16 %v144
    %v610 = vunpack.c.h.b16 %v144
    %v611 = vunpack.c.l.b16 %v145
    %v612 = vunpack.c.h.b16 %v145
    %v613 = vunpack.c.l.b16 %v146
    %v614 = vunpack.c.h.b16 %v146
    %v615 = vunpack.c.l.b16 %v147
    %v616 = vunpack.c.h.b16 %v147
    %v617 = vunpack.c.l.b16 %v148
    %v618 = vunpack.c.h.b16 %v148
    %v619 = vunpack.c.l.b16 %v149
    %v620 = vunpack.c.h.b16 %v149
    %v621 = vunpack.c.l.b16 %v150
    %v622 = vunpack.c.h.b16 %v150
    %v623 = vunpack.c.l.b16 %v151
    %v624 = vunpack.c.h.b16 %v151
    %v625 = vunpack.c.l.b16 %v152
    %v626 = vunpack.c.h.b16 %v152
    %v627 = vunpack.c.l.b16 %v153
    %v628 = vunpack.c.h.b16 %v153
    %v629 = vunpack.c.l.b16 %v154
    %v630 = vunpack.c.h.b16 %v154
    %v631 = vunpack.c.l.b16 %v155
    %v632 = vunpack.c.h.b16 %v155
    %v633 = vunpack.c.l.b16 %v156
    %v634 = vunpack.c.h.b16 %v156
    %v635 = vunpack.c.l.b16 %v157
    %v636 = vunpack.c.h.b16 %v157
    %v637 = vunpack.c.l.b16 %v158
    %v638 = vunpack.c.h.b16 %v158
    %v639 = vunpack.c.l.b16 %v159
    %v640 = vunpack.c.h.b16 %v159
    %v641 = vunpack.c.l.b16 %v160
    %v642 = vunpack.c.h.b16 %v160
    %v643 = vunpack.c.l.b16 %v161
    %v644 = vunpack.c.h.b16 %v161
    %v645 = vunpack.c.l.b16 %v162
    %v646 = vunpack.c.h.b16 %v162
    %v647 = vunpack.c.l.b16 %v163
    %v648 = vunpack.c.h.b16 %v163
    %v649 = vunpack.c.l.b16 %v164
    %v650 = vunpack.c.h.b16 %v164
    %v651 = vunpack.c.l.b16 %v165
    %v652 = vunpack.c.h.b16 %v165
    %v653 = vunpack.c.l.b16 %v166
    %v654 = vunpack.c.h.b16 %v166
    %v655 = vunpack.c.l.b16 %v167
    %v656 = vunpack.c.h.b16 %v167
    %v657 = vunpack.c.l.b16 %v168
    %v658 = vunpack.c.h.b16 %v168
    %v659 = vunpack.c.l.b16 %v169
    %v660 = vunpack.c.h.b16 %v169
    %v661 = vunpack.c.l.b16 %v170
    %v662 = vunpack.c.h.b16 %v170
    %v663 = vunpack.c.l.b16 %v171
    %v664 = vunpack.c.h.b16 %v171
    %v665 = vunpack.c.l.b16 %v172
    %v666 = vunpack.c.h.b16 %v172
    %v667 = vunpack.c.l.b16 %v173
    %v668 = vunpack.c.h.b16 %v173
    %v669 = vunpack.c.l.b16 %v174
    %v670 = vunpack.c.h.b16 %v174
    %v671 = vunpack.c.l.b16 %v175
    %v672 = vunpack.c.h.b16 %v175
    %v673 = vunpack.c.l.b16 %v176
    %v674 = vunpack.c.h.b16 %v176
    %v675 = vunpack.c.l.b16 %v177
    %v676 = vunpack.c.h.b16 %v177
    %v677 = vunpack.c.l.b16 %v178
    %v678 = vunpack.c.h.b16 %v178
    %v679 = vunpack.c.l.b16 %v179
    %v680 = vunpack.c.h.b16 %v179
    %v681 = vunpack.c.l.b16 %v180
    %v682 = vunpack.c.h.b16 %v180
    %v683 = vunpack.c.l.b16 %v181
    %v684 = vunpack.c.h.b16 %v181
    %v685 = vunpack.c.l.b16 %v182
    %v686 = vunpack.c.h.b16 %v182
    %v687 = vunpack.c.l.b16 %v183
    %v688 = vunpack.c.h.b16 %v183
    %v689 = vunpack.c.l.b16 %v184
    %v690 = vunpack.c.h.b16 %v184
    %v691 = vunpack.c.l.b16 %v185
    %v692 = vunpack.c.h.b16 %v185
    %v693 = vunpack.c.l.b16 %v186
    %v694 = vunpack.c.h.b16 %v186
    %v695 = vunpack.c.l.b16 %v187
    %v696 = vunpack.c.h.b16 %v187
    %v697 = vunpack.c.l.b16 %v188
    %v698 = vunpack.c.h.b16 %v188
    %v699 = vunpack.c.l.b16 %v189
    %v700 = vunpack.c.h.b16 %v189
    %v701 = vunpack.c.l.b16 %v190
    %v702 = vunpack.c.h.b16 %v190
    %v703 = vunpack.c.l.b16 %v191
    %v704 = vunpack.c.h.b16 %v191
    %v705 = vunpack.c.l.b16 %v192
    %v706 = vunpack.c.h.b16 %v192
    %v707 = vunpack.c.l.b16 %v193
    %v708 = vunpack.c.h.b16 %v193
    %v709 = vunpack.c.l.b16 %v194
    %v710 = vunpack.c.h.b16 %v194
    %v711 = vunpack.c.l.b16 %v195
    %v712 = vunpack.c.h.b16 %v195
    %v713 = vunpack.c.l.b16 %v196
    %v714 = vunpack.c.h.b16 %v196
    %v715 = vunpack.c.l.b16 %v197
    %v716 = vunpack.c.h.b16 %v197
    %v717 = vunpack.c.l.b16 %v198
    %v718 = vunpack.c.h.b16 %v198
    %v719 = vunpack.c.l.b16 %v199
    %v720 = vunpack.c.h.b16 %v199
    %v721 = vunpack.c.l.b16 %v200
    %v722 = vunpack.c.h.b16 %v200
    %v723 = vunpack.c.l.b16 %v201
    %v724 = vunpack.c.h.b16 %v201
    %v725 = vunpack.c.l.b16 %v202
    %v726 = vunpack.c.h.b16 %v202
    %v727 = vunpack.c.l.b16 %v203
    %v728 = vunpack.c.h.b16 %v203
    %v729 = vunpack.c.l.b16 %v204
    %v730 = vunpack.c.h.b16 %v204
    %v731 = vunpack.c.l.b16 %v205
    %v732 = vunpack.c.h.b16 %v205
    %v733 = vunpack.c.l.b16 %v206
    %v734 = vunpack.c.h.b16 %v206
    %v735 = vunpack.c.l.b16 %v207
    %v736 = vunpack.c.h.b16 %v207
    %v737 = vunpack.c.l.b16 %v208
    %v738 = vunpack.c.h.b16 %v208
    %v739 = vunpack.c.l.b16 %v209
    %v740 = vunpack.c.h.b16 %v209
    %v741 = vunpack.c.l.b16 %v210
    %v742 = vunpack.c.h.b16 %v210
    %v743 = vunpack.c.l.b16 %v211
    %v744 = vunpack.c.h.b16 %v211
    %v745 = vunpack.c.l.b16 %v212
    %v746 = vunpack.c.h.b16 %v212
    %v747 = vunpack.c.l.b16 %v213
    %v748 = vunpack.c.h.b16 %v213
    %v749 = vunpack.c.l.b16 %v214
    %v750 = vunpack.c.h.b16 %v214
    %v751 = vunpack.c.l.b16 %v215
    %v752 = vunpack.c.h.b16 %v215
    %v753 = vunpack.c.l.b16 %v216
    %v754 = vunpack.c.h.b16 %v216
    %v755 = vunpack.c.l.b16 %v217
    %v756 = vunpack.c.h.b16 %v217
    %v757 = vunpack.c.l.b16 %v218
    %v758 = vunpack.c.h.b16 %v218
    %v759 = vunpack.c.l.b16 %v219
    %v760 = vunpack.c.h.b16 %v219
    %v761 = vunpack.c.l.b16 %v220
    %v762 = vunpack.c.h.b16 %v220
    %v763 = vunpack.c.l.b16 %v221
    %v764 = vunpack.c.h.b16 %v221
    %v765 = vunpack.c.l.b16 %v222
    %v766 = vunpack.c.h.b16 %v222
    %v767 = vunpack.c.l.b16 %v223
    %v768 = vunpack.c.h.b16 %v223
    %v769 = vunpack.c.l.b16 %v224
    %v770 = vunpack.c.h.b16 %v224
    %v771 = vunpack.c.l.b16 %v225
    %v772 = vunpack.c.h.b16 %v225
    %v773 = vunpack.c.l.b16 %v226
    %v774 = vunpack.c.h.b16 %v226
    %v775 = vunpack.c.l.b16 %v227
    %v776 = vunpack.c.h.b16 %v227
    %v777 = vunpack.c.l.b16 %v228
    %v778 = vunpack.c.h.b16 %v228
    %v779 = vunpack.c.l.b16 %v229
    %v780 = vunpack.c.h.b16 %v229
    %v781 = vunpack.c.l.b16 %v230
    %v782 = vunpack.c.h.b16 %v230
    %v783 = vunpack.c.l.b16 %v231
    %v784 = vunpack.c.h.b16 %v231
    %v785 = vunpack.c.l.b16 %v232
    %v786 = vunpack.c.h.b16 %v232
    %v787 = vunpack.c.l.b16 %v233
    %v788 = vunpack.c.h.b16 %v233
    %v789 = vunpack.c.l.b16 %v234
    %v790 = vunpack.c.h.b16 %v234
    %v791 = vunpack.c.l.b16 %v235
    %v792 = vunpack.c.h.b16 %v235
    %v793 = vunpack.c.l.b16 %v236
    %v794 = vunpack.c.h.b16 %v236
    %v795 = vunpack.c.l.b16 %v237
    %v796 = vunpack.c.h.b16 %v237
    %v797 = vunpack.c.l.b16 %v238
    %v798 = vunpack.c.h.b16 %v238
    %v799 = vunpack.c.l.b16 %v239
    %v800 = vunpack.c.h.b16 %v239
    %v801 = vunpack.c.l.b16 %v240
    %v802 = vunpack.c.h.b16 %v240
    %v803 = vunpack.c.l.b16 %v241
    %v804 = vunpack.c.h.b16 %v241
    %v805 = vunpack.c.l.b16 %v242
    %v806 = vunpack.c.h.b16 %v242
    %v807 = vunpack.c.l.b16 %v243
    %v808 = vunpack.c.h.b16 %v243
    %v809 = vunpack.c.l.b16 %v244
    %v810 = vunpack.c.h.b16 %v244
    %v811 = vunpack.c.l.b16 %v245
    %v812 = vunpack.c.h.b16 %v245
    %v813 = vunpack.c.l.b16 %v246
    %v814 = vunpack.c.h.b16 %v246
    %v815 = vunpack.c.l.b16 %v247
    %v816 = vunpack.c.h.b16 %v247
    %v817 = vunpack.c.l.b16 %v248
    %v818 = vunpack.c.h.b16 %v248
    %v819 = vunpack.c.l.b16 %v249
    %v820 = vunpack.c.h.b16 %v249
    %v821 = vunpack.c.l.b16 %v250
    %v822 = vunpack.c.h.b16 %v250
    %v823 = vunpack.c.l.b16 %v251
    %v824 = vunpack.c.h.b16 %v251
    %v825 = vunpack.c.l.b16 %v252
    %v826 = vunpack.c.h.b16 %v252
    %v827 = vunpack.c.l.b16 %v253
    %v828 = vunpack.c.h.b16 %v253
    %v829 = vunpack.c.l.b16 %v254
    %v830 = vunpack.c.h.b16 %v254
    %v831 = vunpack.c.l.b16 %v255
    %v832 = vunpack.c.h.b16 %v255
    %v833 = vunpack.c.l.b16 %v256
    %v834 = vunpack.c.h.b16 %v256
    %v835 = vunpack.c.l.b16 %v257
    %v836 = vunpack.c.h.b16 %v257
    %v837 = vunpack.c.l.b16 %v258
    %v838 = vunpack.c.h.b16 %v258
    %v839 = vunpack.c.l.b16 %v259
    %v840 = vunpack.c.h.b16 %v259
    %v841 = vunpack.c.l.b16 %v260
    %v842 = vunpack.c.h.b16 %v260
    %v843 = vunpack.c.l.b16 %v261
    %v844 = vunpack.c.h.b16 %v261
    %v845 = vunpack.c.l.b16 %v262
    %v846 = vunpack.c.h.b16 %v262
    %v847 = vunpack.c.l.b16 %v263
    %v848 = vunpack.c.h.b16 %v263
    %v849 = vunpack.c.l.b16 %v264
    %v850 = vunpack.c.h.b16 %v264
    %v851 = vunpack.c.l.b16 %v265
    %v852 = vunpack.c.h.b16 %v265
    %v853 = vunpack.c.l.b16 %v266
    %v854 = vunpack.c.h.b16 %v266
    %v855 = vunpack.c.l.b16 %v267
    %v856 = vunpack.c.h.b16 %v267
    %v857 = vunpack.c.l.b16 %v268
    %v858 = vunpack.c.h.b16 %v268
    %v859 = vunpack.c.l.b16 %v269
    %v860 = vunpack.c.h.b16 %v269
    %v861 = vunpack.c.l.b16 %v270
    %v862 = vunpack.c.h.b16 %v270
    %v863 = vunpack.c.l.b16 %v271
    %v864 = vunpack.c.h.b16 %v271
    %v865 = vunpack.c.l.b16 %v272
    %v866 = vunpack.c.h.b16 %v272
    %v867 = vunpack.c.l.b16 %v273
    %v868 = vunpack.c.h.b16 %v273
    %v869 = vunpack.c.l.b16 %v274
    %v870 = vunpack.c.h.b16 %v274
    %v871 = vunpack.c.l.b16 %v275
    %v872 = vunpack.c.h.b16 %v275
    %v873 = vunpack.c.l.b16 %v276
    %v874 = vunpack.c.h.b16 %v276
    %v875 = vpack.c.b16 %v495, %v491
    %v876 = vpack.c.b16 %v496, %v492
    %v877 = vpack.c.b16 %v497, %v493
    %v878 = vpack.c.b16 %v498, %v494
    %v879 = vpack.c.b16 %v503, %v499
    %v880 = vpack.c.b16 %v504, %v500
    %v881 = vpack.c.b16 %v505, %v501
    %v882 = vpack.c.b16 %v506, %v502
    %v883 = vpack.c.b16 %v511, %v507
    %v884 = vpack.c.b16 %v512, %v508
    %v885 = vpack.c.b16 %v513, %v509
    %v886 = vpack.c.b16 %v514, %v510
    %v887 = vpack.c.b16 %v519, %v515
    %v888 = vpack.c.b16 %v520, %v516
    %v889 = vpack.c.b16 %v521, %v517
    %v890 = vpack.c.b16 %v522, %v518
    %v891 = vpack.c.b16 %v527, %v523
    %v892 = vpack.c.b16 %v528, %v524
    %v893 = vpack.c.b16 %v529, %v525
    %v894 = vpack.c.b16 %v530, %v526
    %v895 = vpack.c.b16 %v535, %v531
    %v896 = vpack.c.b16 %v536, %v532
    %v897 = vpack.c.b16 %v537, %v533
    %v898 = vpack.c.b16 %v538, %v534
    %v899 = vpack.c.b16 %v543, %v539
    %v900 = vpack.c.b16 %v544, %v540
    %v901 = vpack.c.b16 %v545, %v541
    %v902 = vpack.c.b16 %v546, %v542
    %v903 = vpack.c.b16 %v551, %v547
    %v904 = vpack.c.b16 %v552, %v548
    %v905 = vpack.c.b16 %v553, %v549
    %v906 = vpack.c.b16 %v554, %v550
    %v907 = vpack.c.b16 %v559, %v555
    %v908 = vpack.c.b16 %v560, %v556
    %v909 = vpack.c.b16 %v561, %v557
    %v910 = vpack.c.b16 %v562, %v558
    %v911 = vpack.c.b16 %v567, %v563
    %v912 = vpack.c.b16 %v568, %v564
    %v913 = vpack.c.b16 %v569, %v565
    %v914 = vpack.c.b16 %v570, %v566
    %v915 = vpack.c.b16 %v575, %v571
    %v916 = vpack.c.b16 %v576, %v572
    %v917 = vpack.c.b16 %v577, %v573
    %v918 = vpack.c.b16 %v578, %v574
    %v919 = vpack.c.b16 %v583, %v579
    %v920 = vpack.c.b16 %v584, %v580
    %v921 = vpack.c.b16 %v585, %v581
    %v922 = vpack.c.b16 %v586, %v582
    %v923 = vpack.c.b16 %v591, %v587
    %v924 = vpack.c.b16 %v592, %v588
    %v925 = vpack.c.b16 %v593, %v589
    %v926 = vpack.c.b16 %v594, %v590
    %v927 = vpack.c.b16 %v599, %v595
    %v928 = vpack.c.b16 %v600, %v596
    %v929 = vpack.c.b16 %v601, %v597
    %v930 = vpack.c.b16 %v602, %v598
    %v931 = vpack.c.b16 %v607, %v603
    %v932 = vpack.c.b16 %v608, %v604
    %v933 = vpack.c.b16 %v609, %v605
    %v934 = vpack.c.b16 %v610, %v606
    %v935 = vpack.c.b16 %v615, %v611
    %v936 = vpack.c.b16 %v616, %v612
    %v937 = vpack.c.b16 %v617, %v613
    %v938 = vpack.c.b16 %v618, %v614
    %v939 = vpack.c.b16 %v623, %v619
    %v940 = vpack.c.b16 %v624, %v620
    %v941 = vpack.c.b16 %v625, %v621
    %v942 = vpack.c.b16 %v626, %v622
    %v943 = vpack.c.b16 %v631, %v627
    %v944 = vpack.c.b16 %v632, %v628
    %v945 = vpack.c.b16 %v633, %v629
    %v946 = vpack.c.b16 %v634, %v630
    %v947 = vpack.c.b16 %v639, %v635
    %v948 = vpack.c.b16 %v640, %v636
    %v949 = vpack.c.b16 %v641, %v637
    %v950 = vpack.c.b16 %v642, %v638
    %v951 = vpack.c.b16 %v647, %v643
    %v952 = vpack.c.b16 %v648, %v644
    %v953 = vpack.c.b16 %v649, %v645
    %v954 = vpack.c.b16 %v650, %v646
    %v955 = vpack.c.b16 %v655, %v651
    %v956 = vpack.c.b16 %v656, %v652
    %v957 = vpack.c.b16 %v657, %v653
    %v958 = vpack.c.b16 %v658, %v654
    %v959 = vpack.c.b16 %v663, %v659
    %v960 = vpack.c.b16 %v664, %v660
    %v961 = vpack.c.b16 %v665, %v661
    %v962 = vpack.c.b16 %v666, %v662
    %v963 = vpack.c.b16 %v671, %v667
    %v964 = vpack.c.b16 %v672, %v668
    %v965 = vpack.c.b16 %v673, %v669
    %v966 = vpack.c.b16 %v674, %v670
    %v967 = vpack.c.b16 %v679, %v675
    %v968 = vpack.c.b16 %v680, %v676
    %v969 = vpack.c.b16 %v681, %v677
    %v970 = vpack.c.b16 %v682, %v678
    %v971 = vpack.c.b16 %v687, %v683
    %v972 = vpack.c.b16 %v688, %v684
    %v973 = vpack.c.b16 %v689, %v685
    %v974 = vpack.c.b16 %v690, %v686
    %v975 = vpack.c.b16 %v695, %v691
    %v976 = vpack.c.b16 %v696, %v692
    %v977 = vpack.c.b16 %v697, %v693
    %v978 = vpack.c.b16 %v698, %v694
    %v979 = vpack.c.b16 %v703, %v699
    %v980 = vpack.c.b16 %v704, %v700
    %v981 = vpack.c.b16 %v705, %v701
    %v982 = vpack.c.b16 %v706, %v702
    %v983 = vpack.c.b16 %v711, %v707
    %v984 = vpack.c.b16 %v712, %v708
    %v985 = vpack.c.b16 %v713, %v709
    %v986 = vpack.c.b16 %v714, %v710
    %v987 = vpack.c.b16 %v719, %v715
    %v988 = vpack.c.b16 %v720, %v716
    %v989 = vpack.c.b16 %v721, %v717
    %v990 = vpack.c.b16 %v722, %v718
    %v991 = vpack.c.b16 %v727, %v723
    %v992 = vpack.c.b16 %v728, %v724
    %v993 = vpack.c.b16 %v729, %v725
    %v994 = vpack.c.b16 %v730, %v726
    %v995 = vpack.c.b16 %v735, %v731
    %v996 = vpack.c.b16 %v736, %v732
    %v997 = vpack.c.b16 %v737, %v733
    %v998 = vpack.c.b16 %v738, %v734
    %v999 = vpack.c.b16 %v743, %v739
    %v1000 = vpack.c.b16 %v744, %v740
    %v1001 = vpack.c.b16 %v745, %v741
    %v1002 = vpack.c.b16 %v746, %v742
    %v1003 = vpack.c.b16 %v751, %v747
    %v1004 = vpack.c.b16 %v752, %v748
    %v1005 = vpack.c.b16 %v753, %v749
    %v1006 = vpack.c.b16 %v754, %v750
    %v1007 = vpack.c.b16 %v759, %v755
    %v1008 = vpack.c.b16 %v760, %v756
    %v1009 = vpack.c.b16 %v761, %v757
    %v1010 = vpack.c.b16 %v762, %v758
    %v1011 = vpack.c.b16 %v767, %v763
    %v1012 = vpack.c.b16 %v768, %v764
    %v1013 = vpack.c.b16 %v769, %v765
    %v1014 = vpack.c.b16 %v770, %v766
    %v1015 = vpack.c.b16 %v775, %v771
    %v1016 = vpack.c.b16 %v776, %v772
    %v1017 = vpack.c.b16 %v777, %v773
    %v1018 = vpack.c.b16 %v778, %v774
    %v1019 = vpack.c.b16 %v783, %v779
    %v1020 = vpack.c.b16 %v784, %v780
    %v1021 = vpack.c.b16 %v785, %v781
    %v1022 = vpack.c.b16 %v786, %v782
    %v1023 = vpack.c.b16 %v791, %v787
    %v1024 = vpack.c.b16 %v792, %v788
    %v1025 = vpack.c.b16 %v793, %v789
    %v1026 = vpack.c.b16 %v794, %v790
    %v1027 = vpack.c.b16 %v799, %v795
    %v1028 = vpack.c.b16 %v800, %v796
    %v1029 = vpack.c.b16 %v801, %v797
    %v1030 = vpack.c.b16 %v802, %v798
    %v1031 = vpack.c.b16 %v807, %v803
    %v1032 = vpack.c.b16 %v808, %v804
    %v1033 = vpack.c.b16 %v809, %v805
    %v1034 = vpack.c.b16 %v810, %v806
    %v1035 = vpack.c.b16 %v815, %v811
    %v1036 = vpack.c.b16 %v816, %v812
    %v1037 = vpack.c.b16 %v817, %v813
    %v1038 = vpack.c.b16 %v818, %v814
    %v1039 = vpack.c.b16 %v823, %v819
    %v1040 = vpack.c.b16 %v824, %v820
    %v1041 = vpack.c.b16 %v825, %v821
    %v1042 = vpack.c.b16 %v826, %v822
    %v1043 = vpack.c.b16 %v831, %v827
    %v1044 = vpack.c.b16 %v832, %v828
    %v1045 = vpack.c.b16 %v833, %v829
    %v1046 = vpack.c.b16 %v834, %v830
    %v1047 = vpack.c.b16 %v839, %v835
    %v1048 = vpack.c.b16 %v840, %v836
    %v1049 = vpack.c.b16 %v841, %v837
    %v1050 = vpack.c.b16 %v842, %v838
    %v1051 = vpack.c.b16 %v847, %v843
    %v1052 = vpack.c.b16 %v848, %v844
    %v1053 = vpack.c.b16 %v849, %v845
    %v1054 = vpack.c.b16 %v850, %v846
    %v1055 = vpack.c.b16 %v855, %v851
    %v1056 = vpack.c.b16 %v856, %v852
    %v1057 = vpack.c.b16 %v857, %v853
    %v1058 = vpack.c.b16 %v858, %v854
    %v1059 = vpack.c.b16 %v863, %v859
    %v1060 = vpack.c.b16 %v864, %v860
    %v1061 = vpack.c.b16 %v865, %v861
    %v1062 = vpack.c.b16 %v866, %v862
    %v1063 = vpack.c.b16 %v871, %v867
    %v1064 = vpack.c.b16 %v872, %v868
    %v1065 = vpack.c.b16 %v873, %v869
    %v1066 = vpack.c.b16 %v874, %v870
    %1259 = vmatprep.subr.bf16.mxu0 %v904
    %1260 = vmatpush1.bf16.msra.mxu0 %v903
    %1261 = vmatprep.subr.bf16.mxu0 %v900
    %1262 = vmatpush1.bf16.msra.mxu0 %v899
    %1263 = vmatprep.subr.bf16.mxu0 %v896
    %1264 = vmatpush1.bf16.msra.mxu0 %v895
    %1265 = vmatprep.subr.bf16.mxu0 %v892
    %1266 = vmatpush1.bf16.msra.mxu0 %v891
    %1267 = vmatprep.subr.bf16.mxu0 %v888
    %1268 = vmatpush1.bf16.msra.mxu0 %v887
    %1269 = vmatprep.subr.bf16.mxu0 %v884
    %1270 = vmatpush1.bf16.msra.mxu0 %v883
    %1271 = vmatprep.subr.bf16.mxu0 %v880
    %1272 = vmatpush1.bf16.msra.mxu0 %v879
    %1273 = vmatprep.subr.bf16.mxu0 %v876
    %1274 = vmatpush1.bf16.msra.mxu0 %v875
    %1275 = vmatprep.subr.bf16.mxu0 %v936
    %1276 = vmatpush2.bf16.msra.mxu0 %v935
    %1277 = vmatprep.subr.bf16.mxu0 %v932
    %1278 = vmatpush2.bf16.msra.mxu0 %v931
    %1279 = vmatprep.subr.bf16.mxu0 %v928
    %1280 = vmatpush2.bf16.msra.mxu0 %v927
    %1281 = vmatprep.subr.bf16.mxu0 %v924
    %1282 = vmatpush2.bf16.msra.mxu0 %v923
    %1283 = vmatprep.subr.bf16.mxu0 %v920
    %1284 = vmatpush2.bf16.msra.mxu0 %v919
    %1285 = vmatprep.subr.bf16.mxu0 %v916
    %1286 = vmatpush2.bf16.msra.mxu0 %v915
    %1287 = vmatprep.subr.bf16.mxu0 %v912
    %1288 = vmatpush2.bf16.msra.mxu0 %v911
    %1289 = vmatprep.subr.bf16.mxu0 %v908
    %1290 = vmatpush2.bf16.msra.mxu0 %v907
    %1291 = vmatprep.mubr.bf16.mxu0 %v80
    %1292 = vmatmul.mubr.bf16.gmra.mxu0 %v79
    %v1293 = vpop.f32.mrf.mxu0
    %v1294 = vadd.f32 %v282, %v1293
    %v1295 = vpop.f32.mrf.mxu0
    %v1296 = vadd.f32 %v286, %v1295
    %v1297 = vpop.f32.mrf.mxu0
    %v1298 = vpop.f32.mrf.mxu0
    %1299 = vdwg.mxu0
    %1300 = vmatprep.subr.bf16.mxu0 %v968
    %1301 = vmatpush1.bf16.msra.mxu0 %v967
    %1302 = vmatprep.subr.bf16.mxu0 %v964
    %1303 = vmatpush1.bf16.msra.mxu0 %v963
    %1304 = vmatprep.subr.bf16.mxu0 %v960
    %1305 = vmatpush1.bf16.msra.mxu0 %v959
    %1306 = vmatprep.subr.bf16.mxu0 %v956
    %1307 = vmatpush1.bf16.msra.mxu0 %v955
    %1308 = vmatprep.subr.bf16.mxu0 %v952
    %1309 = vmatpush1.bf16.msra.mxu0 %v951
    %1310 = vmatprep.subr.bf16.mxu0 %v948
    %1311 = vmatpush1.bf16.msra.mxu0 %v947
    %1312 = vmatprep.subr.bf16.mxu0 %v944
    %1313 = vmatpush1.bf16.msra.mxu0 %v943
    %1314 = vmatprep.subr.bf16.mxu0 %v940
    %1315 = vmatpush1.bf16.msra.mxu0 %v939
    %1316 = vmatprep.subr.bf16.mxu0 %v1000
    %1317 = vmatpush2.bf16.msra.mxu0 %v999
    %1318 = vmatprep.subr.bf16.mxu0 %v996
    %1319 = vmatpush2.bf16.msra.mxu0 %v995
    %1320 = vmatprep.subr.bf16.mxu0 %v992
    %1321 = vmatpush2.bf16.msra.mxu0 %v991
    %1322 = vmatprep.subr.bf16.mxu0 %v988
    %1323 = vmatpush2.bf16.msra.mxu0 %v987
    %1324 = vmatprep.subr.bf16.mxu0 %v984
    %1325 = vmatpush2.bf16.msra.mxu0 %v983
    %1326 = vmatprep.subr.bf16.mxu0 %v980
    %1327 = vmatpush2.bf16.msra.mxu0 %v979
    %1328 = vmatprep.subr.bf16.mxu0 %v976
    %1329 = vmatpush2.bf16.msra.mxu0 %v975
    %1330 = vmatprep.subr.bf16.mxu0 %v972
    %1331 = vmatpush2.bf16.msra.mxu0 %v971
    %1332 = vmatprep.mubr.bf16.mxu0 %v82
    %1333 = vmatmul.mubr.bf16.gmra.mxu0 %v81
    %v1334 = vpop.f32.mrf.mxu0
    %v1335 = vadd.f32 %v1294, %v1334
    %v1336 = vpop.f32.mrf.mxu0
    %v1337 = vadd.f32 %v1296, %v1336
    %v1338 = vpop.f32.mrf.mxu0
    %v1339 = vpop.f32.mrf.mxu0
    %1340 = vdwg.mxu0
    %1341 = vmatprep.subr.bf16.mxu0 %v1032
    %1342 = vmatpush1.bf16.msra.mxu0 %v1031
    %1343 = vmatprep.subr.bf16.mxu0 %v1028
    %1344 = vmatpush1.bf16.msra.mxu0 %v1027
    %1345 = vmatprep.subr.bf16.mxu0 %v1024
    %1346 = vmatpush1.bf16.msra.mxu0 %v1023
    %1347 = vmatprep.subr.bf16.mxu0 %v1020
    %1348 = vmatpush1.bf16.msra.mxu0 %v1019
    %1349 = vmatprep.subr.bf16.mxu0 %v1016
    %1350 = vmatpush1.bf16.msra.mxu0 %v1015
    %1351 = vmatprep.subr.bf16.mxu0 %v1012
    %1352 = vmatpush1.bf16.msra.mxu0 %v1011
    %1353 = vmatprep.subr.bf16.mxu0 %v1008
    %1354 = vmatpush1.bf16.msra.mxu0 %v1007
    %1355 = vmatprep.subr.bf16.mxu0 %v1004
    %1356 = vmatpush1.bf16.msra.mxu0 %v1003
    %1357 = vmatprep.subr.bf16.mxu0 %v1064
    %1358 = vmatpush2.bf16.msra.mxu0 %v1063
    %1359 = vmatprep.subr.bf16.mxu0 %v1060
    %1360 = vmatpush2.bf16.msra.mxu0 %v1059
    %1361 = vmatprep.subr.bf16.mxu0 %v1056
    %1362 = vmatpush2.bf16.msra.mxu0 %v1055
    %1363 = vmatprep.subr.bf16.mxu0 %v1052
    %1364 = vmatpush2.bf16.msra.mxu0 %v1051
    %1365 = vmatprep.subr.bf16.mxu0 %v1048
    %1366 = vmatpush2.bf16.msra.mxu0 %v1047
    %1367 = vmatprep.subr.bf16.mxu0 %v1044
    %1368 = vmatpush2.bf16.msra.mxu0 %v1043
    %1369 = vmatprep.subr.bf16.mxu0 %v1040
    %1370 = vmatpush2.bf16.msra.mxu0 %v1039
    %1371 = vmatprep.subr.bf16.mxu0 %v1036
    %1372 = vmatpush2.bf16.msra.mxu0 %v1035
    %1373 = vmatprep.mubr.bf16.mxu0 %v84
    %1374 = vmatmul.mubr.bf16.gmra.mxu0 %v83
    %v1375 = vpop.f32.mrf.mxu0
    %v1376 = vadd.f32 %v1335, %v1375
    %v1377 = vpop.f32.mrf.mxu0
    %v1378 = vadd.f32 %v1337, %v1377
    %v1379 = vpop.f32.mrf.mxu0
    %v1380 = vpop.f32.mrf.mxu0
    %1381 = vdwg.mxu0
    %1382 = vmatprep.subr.bf16.mxu0 %v906
    %1383 = vmatpush1.bf16.msra.mxu0 %v905
    %1384 = vmatprep.subr.bf16.mxu0 %v902
    %1385 = vmatpush1.bf16.msra.mxu0 %v901
    %1386 = vmatprep.subr.bf16.mxu0 %v898
    %1387 = vmatpush1.bf16.msra.mxu0 %v897
    %1388 = vmatprep.subr.bf16.mxu0 %v894
    %1389 = vmatpush1.bf16.msra.mxu0 %v893
    %1390 = vmatprep.subr.bf16.mxu0 %v890
    %1391 = vmatpush1.bf16.msra.mxu0 %v889
    %1392 = vmatprep.subr.bf16.mxu0 %v886
    %1393 = vmatpush1.bf16.msra.mxu0 %v885
    %1394 = vmatprep.subr.bf16.mxu0 %v882
    %1395 = vmatpush1.bf16.msra.mxu0 %v881
    %1396 = vmatprep.subr.bf16.mxu0 %v878
    %1397 = vmatpush1.bf16.msra.mxu0 %v877
    %1398 = vmatprep.subr.bf16.mxu0 %v938
    %1399 = vmatpush2.bf16.msra.mxu0 %v937
    %1400 = vmatprep.subr.bf16.mxu0 %v934
    %1401 = vmatpush2.bf16.msra.mxu0 %v933
    %1402 = vmatprep.subr.bf16.mxu0 %v930
    %1403 = vmatpush2.bf16.msra.mxu0 %v929
    %1404 = vmatprep.subr.bf16.mxu0 %v926
    %1405 = vmatpush2.bf16.msra.mxu0 %v925
    %1406 = vmatprep.subr.bf16.mxu0 %v922
    %1407 = vmatpush2.bf16.msra.mxu0 %v921
    %1408 = vmatprep.subr.bf16.mxu0 %v918
    %1409 = vmatpush2.bf16.msra.mxu0 %v917
    %1410 = vmatprep.subr.bf16.mxu0 %v914
    %1411 = vmatpush2.bf16.msra.mxu0 %v913
    %1412 = vmatprep.subr.bf16.mxu0 %v910
    %1413 = vmatpush2.bf16.msra.mxu0 %v909
    %1414 = vmatprep.mubr.bf16.mxu0 %v80
    %1415 = vmatmul.mubr.bf16.gmra.mxu0 %v79
    %v1416 = vpop.f32.mrf.mxu0
    %v1417 = vadd.f32 %v290, %v1416
    %v1418 = vpop.f32.mrf.mxu0
    %v1419 = vadd.f32 %v294, %v1418
    %v1420 = vpop.f32.mrf.mxu0
    %v1421 = vpop.f32.mrf.mxu0
    %1422 = vdwg.mxu0
    %1423 = vmatprep.subr.bf16.mxu0 %v970
    %1424 = vmatpush1.bf16.msra.mxu0 %v969
    %1425 = vmatprep.subr.bf16.mxu0 %v966
    %1426 = vmatpush1.bf16.msra.mxu0 %v965
    %1427 = vmatprep.subr.bf16.mxu0 %v962
    %1428 = vmatpush1.bf16.msra.mxu0 %v961
    %1429 = vmatprep.subr.bf16.mxu0 %v958
    %1430 = vmatpush1.bf16.msra.mxu0 %v957
    %1431 = vmatprep.subr.bf16.mxu0 %v954
    %1432 = vmatpush1.bf16.msra.mxu0 %v953
    %1433 = vmatprep.subr.bf16.mxu0 %v950
    %1434 = vmatpush1.bf16.msra.mxu0 %v949
    %1435 = vmatprep.subr.bf16.mxu0 %v946
    %1436 = vmatpush1.bf16.msra.mxu0 %v945
    %1437 = vmatprep.subr.bf16.mxu0 %v942
    %1438 = vmatpush1.bf16.msra.mxu0 %v941
    %1439 = vmatprep.subr.bf16.mxu0 %v1002
    %1440 = vmatpush2.bf16.msra.mxu0 %v1001
    %1441 = vmatprep.subr.bf16.mxu0 %v998
    %1442 = vmatpush2.bf16.msra.mxu0 %v997
    %1443 = vmatprep.subr.bf16.mxu0 %v994
    %1444 = vmatpush2.bf16.msra.mxu0 %v993
    %1445 = vmatprep.subr.bf16.mxu0 %v990
    %1446 = vmatpush2.bf16.msra.mxu0 %v989
    %1447 = vmatprep.subr.bf16.mxu0 %v986
    %1448 = vmatpush2.bf16.msra.mxu0 %v985
    %1449 = vmatprep.subr.bf16.mxu0 %v982
    %1450 = vmatpush2.bf16.msra.mxu0 %v981
    %1451 = vmatprep.subr.bf16.mxu0 %v978
    %1452 = vmatpush2.bf16.msra.mxu0 %v977
    %1453 = vmatprep.subr.bf16.mxu0 %v974
    %1454 = vmatpush2.bf16.msra.mxu0 %v973
    %1455 = vmatprep.mubr.bf16.mxu0 %v82
    %1456 = vmatmul.mubr.bf16.gmra.mxu0 %v81
    %v1457 = vpop.f32.mrf.mxu0
    %v1458 = vadd.f32 %v1417, %v1457
    %v1459 = vpop.f32.mrf.mxu0
    %v1460 = vadd.f32 %v1419, %v1459
    %v1461 = vpop.f32.mrf.mxu0
    %v1462 = vpop.f32.mrf.mxu0
    %1463 = vdwg.mxu0
    %1464 = vmatprep.subr.bf16.mxu0 %v1034
    %1465 = vmatpush1.bf16.msra.mxu0 %v1033
    %1466 = vmatprep.subr.bf16.mxu0 %v1030
    %1467 = vmatpush1.bf16.msra.mxu0 %v1029
    %1468 = vmatprep.subr.bf16.mxu0 %v1026
    %1469 = vmatpush1.bf16.msra.mxu0 %v1025
    %1470 = vmatprep.subr.bf16.mxu0 %v1022
    %1471 = vmatpush1.bf16.msra.mxu0 %v1021
    %1472 = vmatprep.subr.bf16.mxu0 %v1018
    %1473 = vmatpush1.bf16.msra.mxu0 %v1017
    %1474 = vmatprep.subr.bf16.mxu0 %v1014
    %1475 = vmatpush1.bf16.msra.mxu0 %v1013
    %1476 = vmatprep.subr.bf16.mxu0 %v1010
    %1477 = vmatpush1.bf16.msra.mxu0 %v1009
    %1478 = vmatprep.subr.bf16.mxu0 %v1006
    %1479 = vmatpush1.bf16.msra.mxu0 %v1005
    %1480 = vmatprep.subr.bf16.mxu0 %v1066
    %1481 = vmatpush2.bf16.msra.mxu0 %v1065
    %1482 = vmatprep.subr.bf16.mxu0 %v1062
    %1483 = vmatpush2.bf16.msra.mxu0 %v1061
    %1484 = vmatprep.subr.bf16.mxu0 %v1058
    %1485 = vmatpush2.bf16.msra.mxu0 %v1057
    %1486 = vmatprep.subr.bf16.mxu0 %v1054
    %1487 = vmatpush2.bf16.msra.mxu0 %v1053
    %1488 = vmatprep.subr.bf16.mxu0 %v1050
    %1489 = vmatpush2.bf16.msra.mxu0 %v1049
    %1490 = vmatprep.subr.bf16.mxu0 %v1046
    %1491 = vmatpush2.bf16.msra.mxu0 %v1045
    %1492 = vmatprep.subr.bf16.mxu0 %v1042
    %1493 = vmatpush2.bf16.msra.mxu0 %v1041
    %1494 = vmatprep.subr.bf16.mxu0 %v1038
    %1495 = vmatpush2.bf16.msra.mxu0 %v1037
    %1496 = vmatprep.mubr.bf16.mxu0 %v84
    %1497 = vmatmul.mubr.bf16.gmra.mxu0 %v83
    %v1498 = vpop.f32.mrf.mxu0
    %v1499 = vadd.f32 %v1458, %v1498
    %v1500 = vpop.f32.mrf.mxu0
    %v1501 = vadd.f32 %v1460, %v1500
    %v1502 = vpop.f32.mrf.mxu0
    %v1503 = vpop.f32.mrf.mxu0
    %1504 = vdwg.mxu0
    %v1505 = vmax.f32 %v1376, 0.0
    %v1506 = vmax.f32 %v1378, 0.0
    %v1507 = vmax.f32 %v1499, 0.0
    %v1508 = vmax.f32 %v1501, 0.0
    %v1509 = vpack.c.bf16 %v1505, %v1505
    %v1510 = vpack.c.bf16 %v1506, %v1506
    %v1511 = vpack.c.bf16 %v1507, %v1507
    %v1512 = vpack.c.bf16 %v1508, %v1508
    %v1513 = vld [vmem:[#allocation8] sm:$0xff]
    %v1514 = vld [vmem:[#allocation8 + $0x8] sm:$0xf]
    %v1515 = vld [vmem:[#allocation8 + $0xc] sm:$0xff]
    %v1516 = vld [vmem:[#allocation8 + $0x14] sm:$0xf]
    %v1517 = vld [vmem:[#allocation8 + $0x18] sm:$0xff]
    %v1518 = vld [vmem:[#allocation8 + $0x20] sm:$0xf]
    %v1519 = vld [vmem:[#allocation8 + $0x24] sm:$0xff]
    %v1520 = vld [vmem:[#allocation8 + $0x2c] sm:$0xf]
    %v1521 = vld [vmem:[#allocation8 + $0x30] sm:$0xff]
    %v1522 = vld [vmem:[#allocation8 + $0x38] sm:$0xf]
    %v1523 = vld [vmem:[#allocation8 + $0x3c] sm:$0xff]
    %v1524 = vld [vmem:[#allocation8 + $0x44] sm:$0xf]
    %v1525 = vld [vmem:[#allocation8 + $0x48] sm:$0xff]
    %v1526 = vld [vmem:[#allocation8 + $0x50] sm:$0xf]
    %v1527 = vld [vmem:[#allocation8 + $0x54] sm:$0xff]
    %v1528 = vld [vmem:[#allocation8 + $0x5c] sm:$0xf]
    %v1529 = vld [vmem:[#allocation8 + $0x60] sm:$0xff]
    %v1530 = vld [vmem:[#allocation8 + $0x68] sm:$0xf]
    %v1531 = vld [vmem:[#allocation8 + $0x6c] sm:$0xff]
    %v1532 = vld [vmem:[#allocation8 + $0x74] sm:$0xf]
    %v1533 = vld [vmem:[#allocation8 + $0x78] sm:$0xff]
    %v1534 = vld [vmem:[#allocation8 + $0x80] sm:$0xf]
    %v1535 = vld [vmem:[#allocation8 + $0x84] sm:$0xff]
    %v1536 = vld [vmem:[#allocation8 + $0x8c] sm:$0xf]
    %v1537 = vld [vmem:[#allocation8 + $0x90] sm:$0xff]
    %v1538 = vld [vmem:[#allocation8 + $0x98] sm:$0xf]
    %v1539 = vld [vmem:[#allocation8 + $0x9c] sm:$0xff]
    %v1540 = vld [vmem:[#allocation8 + $0xa4] sm:$0xf]
    %v1541 = vld [vmem:[#allocation8 + $0xa8] sm:$0xff]
    %v1542 = vld [vmem:[#allocation8 + $0xb0] sm:$0xf]
    %v1543 = vld [vmem:[#allocation8 + $0xb4] sm:$0xff]
    %v1544 = vld [vmem:[#allocation8 + $0xbc] sm:$0xf]
    %v1545 = vld [vmem:[#allocation8 + $0xc0] sm:$0xff]
    %v1546 = vld [vmem:[#allocation8 + $0xc8] sm:$0xf]
    %v1547 = vld [vmem:[#allocation8 + $0xcc] sm:$0xff]
    %v1548 = vld [vmem:[#allocation8 + $0xd4] sm:$0xf]
    %v1549 = vld [vmem:[#allocation8 + $0xd8] sm:$0xff]
    %v1550 = vld [vmem:[#allocation8 + $0xe0] sm:$0xf]
    %v1551 = vld [vmem:[#allocation8 + $0xe4] sm:$0xff]
    %v1552 = vld [vmem:[#allocation8 + $0xec] sm:$0xf]
    %v1553 = vld [vmem:[#allocation8 + $0xf0] sm:$0xff]
    %v1554 = vld [vmem:[#allocation8 + $0xf8] sm:$0xf]
    %v1555 = vld [vmem:[#allocation8 + $0xfc] sm:$0xff]
    %v1556 = vld [vmem:[#allocation8 + $0x104] sm:$0xf]
    %v1557 = vld [vmem:[#allocation8 + $0x108] sm:$0xff]
    %v1558 = vld [vmem:[#allocation8 + $0x110] sm:$0xf]
    %v1559 = vld [vmem:[#allocation8 + $0x114] sm:$0xff]
    %v1560 = vld [vmem:[#allocation8 + $0x11c] sm:$0xf]
    %v1561 = vld [vmem:[#allocation8 + $0x120] sm:$0xff]
    %v1562 = vld [vmem:[#allocation8 + $0x128] sm:$0xf]
    %v1563 = vld [vmem:[#allocation8 + $0x12c] sm:$0xff]
    %v1564 = vld [vmem:[#allocation8 + $0x134] sm:$0xf]
    %v1565 = vld [vmem:[#allocation8 + $0x138] sm:$0xff]
    %v1566 = vld [vmem:[#allocation8 + $0x140] sm:$0xf]
    %v1567 = vld [vmem:[#allocation8 + $0x144] sm:$0xff]
    %v1568 = vld [vmem:[#allocation8 + $0x14c] sm:$0xf]
    %v1569 = vld [vmem:[#allocation8 + $0x150] sm:$0xff]
    %v1570 = vld [vmem:[#allocation8 + $0x158] sm:$0xf]
    %v1571 = vld [vmem:[#allocation8 + $0x15c] sm:$0xff]
    %v1572 = vld [vmem:[#allocation8 + $0x164] sm:$0xf]
    %v1573 = vld [vmem:[#allocation8 + $0x168] sm:$0xff]
    %v1574 = vld [vmem:[#allocation8 + $0x170] sm:$0xf]
    %v1575 = vld [vmem:[#allocation8 + $0x174] sm:$0xff]
    %v1576 = vld [vmem:[#allocation8 + $0x17c] sm:$0xf]
    %v1577 = vld [vmem:[#allocation8 + $0x180] sm:$0xff]
    %v1578 = vld [vmem:[#allocation8 + $0x188] sm:$0xf]
    %v1579 = vld [vmem:[#allocation8 + $0x18c] sm:$0xff]
    %v1580 = vld [vmem:[#allocation8 + $0x194] sm:$0xf]
    %v1581 = vld [vmem:[#allocation8 + $0x198] sm:$0xff]
    %v1582 = vld [vmem:[#allocation8 + $0x1a0] sm:$0xf]
    %v1583 = vld [vmem:[#allocation8 + $0x1a4] sm:$0xff]
    %v1584 = vld [vmem:[#allocation8 + $0x1ac] sm:$0xf]
    %v1585 = vld [vmem:[#allocation8 + $0x1b0] sm:$0xff]
    %v1586 = vld [vmem:[#allocation8 + $0x1b8] sm:$0xf]
    %v1587 = vld [vmem:[#allocation8 + $0x1bc] sm:$0xff]
    %v1588 = vld [vmem:[#allocation8 + $0x1c4] sm:$0xf]
    %v1589 = vld [vmem:[#allocation8 + $0x1c8] sm:$0xff]
    %v1590 = vld [vmem:[#allocation8 + $0x1d0] sm:$0xf]
    %v1591 = vld [vmem:[#allocation8 + $0x1d4] sm:$0xff]
    %v1592 = vld [vmem:[#allocation8 + $0x1dc] sm:$0xf]
    %v1593 = vld [vmem:[#allocation8 + $0x1e0] sm:$0xff]
    %v1594 = vld [vmem:[#allocation8 + $0x1e8] sm:$0xf]
    %v1595 = vld [vmem:[#allocation8 + $0x1ec] sm:$0xff]
    %v1596 = vld [vmem:[#allocation8 + $0x1f4] sm:$0xf]
    %v1597 = vld [vmem:[#allocation8 + $0x1f8] sm:$0xff]
    %v1598 = vld [vmem:[#allocation8 + $0x200] sm:$0xf]
    %v1599 = vld [vmem:[#allocation8 + $0x204] sm:$0xff]
    %v1600 = vld [vmem:[#allocation8 + $0x20c] sm:$0xf]
    %v1601 = vld [vmem:[#allocation8 + $0x210] sm:$0xff]
    %v1602 = vld [vmem:[#allocation8 + $0x218] sm:$0xf]
    %v1603 = vld [vmem:[#allocation8 + $0x21c] sm:$0xff]
    %v1604 = vld [vmem:[#allocation8 + $0x224] sm:$0xf]
    %v1605 = vld [vmem:[#allocation8 + $0x228] sm:$0xff]
    %v1606 = vld [vmem:[#allocation8 + $0x230] sm:$0xf]
    %v1607 = vld [vmem:[#allocation8 + $0x234] sm:$0xff]
    %v1608 = vld [vmem:[#allocation8 + $0x23c] sm:$0xf]
    %v1609 = vld [vmem:[#allocation8 + $0x240] sm:$0xff]
    %v1610 = vld [vmem:[#allocation8 + $0x248] sm:$0xf]
    %v1611 = vld [vmem:[#allocation8 + $0x24c] sm:$0xff]
    %v1612 = vld [vmem:[#allocation8 + $0x254] sm:$0xf]
    %v1613 = vld [vmem:[#allocation8 + $0x258] sm:$0xff]
    %v1614 = vld [vmem:[#allocation8 + $0x260] sm:$0xf]
    %v1615 = vld [vmem:[#allocation8 + $0x264] sm:$0xff]
    %v1616 = vld [vmem:[#allocation8 + $0x26c] sm:$0xf]
    %v1617 = vld [vmem:[#allocation8 + $0x270] sm:$0xff]
    %v1618 = vld [vmem:[#allocation8 + $0x278] sm:$0xf]
    %v1619 = vld [vmem:[#allocation8 + $0x27c] sm:$0xff]
    %v1620 = vld [vmem:[#allocation8 + $0x284] sm:$0xf]
    %v1621 = vld [vmem:[#allocation8 + $0x288] sm:$0xff]
    %v1622 = vld [vmem:[#allocation8 + $0x290] sm:$0xf]
    %v1623 = vld [vmem:[#allocation8 + $0x294] sm:$0xff]
    %v1624 = vld [vmem:[#allocation8 + $0x29c] sm:$0xf]
    %v1625 = vld [vmem:[#allocation8 + $0x2a0] sm:$0xff]
    %v1626 = vld [vmem:[#allocation8 + $0x2a8] sm:$0xf]
    %v1627 = vld [vmem:[#allocation8 + $0x2ac] sm:$0xff]
    %v1628 = vld [vmem:[#allocation8 + $0x2b4] sm:$0xf]
    %v1629 = vld [vmem:[#allocation8 + $0x2b8] sm:$0xff]
    %v1630 = vld [vmem:[#allocation8 + $0x2c0] sm:$0xf]
    %v1631 = vld [vmem:[#allocation8 + $0x2c4] sm:$0xff]
    %v1632 = vld [vmem:[#allocation8 + $0x2cc] sm:$0xf]
    %v1633 = vld [vmem:[#allocation8 + $0x2d0] sm:$0xff]
    %v1634 = vld [vmem:[#allocation8 + $0x2d8] sm:$0xf]
    %v1635 = vld [vmem:[#allocation8 + $0x2dc] sm:$0xff]
    %v1636 = vld [vmem:[#allocation8 + $0x2e4] sm:$0xf]
    %v1637 = vld [vmem:[#allocation8 + $0x2e8] sm:$0xff]
    %v1638 = vld [vmem:[#allocation8 + $0x2f0] sm:$0xf]
    %v1639 = vld [vmem:[#allocation8 + $0x2f4] sm:$0xff]
    %v1640 = vld [vmem:[#allocation8 + $0x2fc] sm:$0xf]
    %v1641 = vld [vmem:[%s4] sm:$0x7]
    %v1643 = vlaneseq
    %v1644 = vshrl.u32 %v1643, 7
    %v1645 = vsub.s32 0, %v1644
    %v1646 = vrot.slane %v1641, %v1645
    %v1647 = vlaneseq
    %v1648 = vshrl.u32 %v1647, 7
    %v1649 = vsub.s32 1, %v1648
    %v1650 = vrot.slane %v1641, %v1649
    %v1651 = vlaneseq
    %v1652 = vshrl.u32 %v1651, 7
    %v1653 = vsub.s32 2, %v1652
    %v1654 = vrot.slane %v1641, %v1653
    %v1786 = vunpack.c.l.b16 %v1513
    %v1787 = vunpack.c.h.b16 %v1513
    %v1788 = vunpack.c.l.b16 %v1514
    %v1789 = vunpack.c.l.b16 %v1515
    %v1790 = vunpack.c.h.b16 %v1515
    %v1791 = vunpack.c.l.b16 %v1516
    %v1792 = vunpack.c.l.b16 %v1517
    %v1793 = vunpack.c.h.b16 %v1517
    %v1794 = vunpack.c.l.b16 %v1518
    %v1795 = vunpack.c.l.b16 %v1519
    %v1796 = vunpack.c.h.b16 %v1519
    %v1797 = vunpack.c.l.b16 %v1520
    %v1798 = vunpack.c.l.b16 %v1521
    %v1799 = vunpack.c.h.b16 %v1521
    %v1800 = vunpack.c.l.b16 %v1522
    %v1801 = vunpack.c.l.b16 %v1523
    %v1802 = vunpack.c.h.b16 %v1523
    %v1803 = vunpack.c.l.b16 %v1524
    %v1804 = vunpack.c.l.b16 %v1525
    %v1805 = vunpack.c.h.b16 %v1525
    %v1806 = vunpack.c.l.b16 %v1526
    %v1807 = vunpack.c.l.b16 %v1527
    %v1808 = vunpack.c.h.b16 %v1527
    %v1809 = vunpack.c.l.b16 %v1528
    %v1810 = vunpack.c.l.b16 %v1529
    %v1811 = vunpack.c.h.b16 %v1529
    %v1812 = vunpack.c.l.b16 %v1530
    %v1813 = vunpack.c.l.b16 %v1531
    %v1814 = vunpack.c.h.b16 %v1531
    %v1815 = vunpack.c.l.b16 %v1532
    %v1816 = vunpack.c.l.b16 %v1533
    %v1817 = vunpack.c.h.b16 %v1533
    %v1818 = vunpack.c.l.b16 %v1534
    %v1819 = vunpack.c.l.b16 %v1535
    %v1820 = vunpack.c.h.b16 %v1535
    %v1821 = vunpack.c.l.b16 %v1536
    %v1822 = vunpack.c.l.b16 %v1537
    %v1823 = vunpack.c.h.b16 %v1537
    %v1824 = vunpack.c.l.b16 %v1538
    %v1825 = vunpack.c.l.b16 %v1539
    %v1826 = vunpack.c.h.b16 %v1539
    %v1827 = vunpack.c.l.b16 %v1540
    %v1828 = vunpack.c.l.b16 %v1541
    %v1829 = vunpack.c.h.b16 %v1541
    %v1830 = vunpack.c.l.b16 %v1542
    %v1831 = vunpack.c.l.b16 %v1543
    %v1832 = vunpack.c.h.b16 %v1543
    %v1833 = vunpack.c.l.b16 %v1544
    %v1834 = vunpack.c.l.b16 %v1545
    %v1835 = vunpack.c.h.b16 %v1545
    %v1836 = vunpack.c.l.b16 %v1546
    %v1837 = vunpack.c.l.b16 %v1547
    %v1838 = vunpack.c.h.b16 %v1547
    %v1839 = vunpack.c.l.b16 %v1548
    %v1840 = vunpack.c.l.b16 %v1549
    %v1841 = vunpack.c.h.b16 %v1549
    %v1842 = vunpack.c.l.b16 %v1550
    %v1843 = vunpack.c.l.b16 %v1551
    %v1844 = vunpack.c.h.b16 %v1551
    %v1845 = vunpack.c.l.b16 %v1552
    %v1846 = vunpack.c.l.b16 %v1553
    %v1847 = vunpack.c.h.b16 %v1553
    %v1848 = vunpack.c.l.b16 %v1554
    %v1849 = vunpack.c.l.b16 %v1555
    %v1850 = vunpack.c.h.b16 %v1555
    %v1851 = vunpack.c.l.b16 %v1556
    %v1852 = vunpack.c.l.b16 %v1557
    %v1853 = vunpack.c.h.b16 %v1557
    %v1854 = vunpack.c.l.b16 %v1558
    %v1855 = vunpack.c.l.b16 %v1559
    %v1856 = vunpack.c.h.b16 %v1559
    %v1857 = vunpack.c.l.b16 %v1560
    %v1858 = vunpack.c.l.b16 %v1561
    %v1859 = vunpack.c.h.b16 %v1561
    %v1860 = vunpack.c.l.b16 %v1562
    %v1861 = vunpack.c.l.b16 %v1563
    %v1862 = vunpack.c.h.b16 %v1563
    %v1863 = vunpack.c.l.b16 %v1564
    %v1864 = vunpack.c.l.b16 %v1565
    %v1865 = vunpack.c.h.b16 %v1565
    %v1866 = vunpack.c.l.b16 %v1566
    %v1867 = vunpack.c.l.b16 %v1567
    %v1868 = vunpack.c.h.b16 %v1567
    %v1869 = vunpack.c.l.b16 %v1568
    %v1870 = vunpack.c.l.b16 %v1569
    %v1871 = vunpack.c.h.b16 %v1569
    %v1872 = vunpack.c.l.b16 %v1570
    %v1873 = vunpack.c.l.b16 %v1571
    %v1874 = vunpack.c.h.b16 %v1571
    %v1875 = vunpack.c.l.b16 %v1572
    %v1876 = vunpack.c.l.b16 %v1573
    %v1877 = vunpack.c.h.b16 %v1573
    %v1878 = vunpack.c.l.b16 %v1574
    %v1879 = vunpack.c.l.b16 %v1575
    %v1880 = vunpack.c.h.b16 %v1575
    %v1881 = vunpack.c.l.b16 %v1576
    %v1882 = vunpack.c.l.b16 %v1577
    %v1883 = vunpack.c.h.b16 %v1577
    %v1884 = vunpack.c.l.b16 %v1578
    %v1885 = vunpack.c.l.b16 %v1579
    %v1886 = vunpack.c.h.b16 %v1579
    %v1887 = vunpack.c.l.b16 %v1580
    %v1888 = vunpack.c.l.b16 %v1581
    %v1889 = vunpack.c.h.b16 %v1581
    %v1890 = vunpack.c.l.b16 %v1582
    %v1891 = vunpack.c.l.b16 %v1583
    %v1892 = vunpack.c.h.b16 %v1583
    %v1893 = vunpack.c.l.b16 %v1584
    %v1894 = vunpack.c.l.b16 %v1585
    %v1895 = vunpack.c.h.b16 %v1585
    %v1896 = vunpack.c.l.b16 %v1586
    %v1897 = vunpack.c.l.b16 %v1587
    %v1898 = vunpack.c.h.b16 %v1587
    %v1899 = vunpack.c.l.b16 %v1588
    %v1900 = vunpack.c.l.b16 %v1589
    %v1901 = vunpack.c.h.b16 %v1589
    %v1902 = vunpack.c.l.b16 %v1590
    %v1903 = vunpack.c.l.b16 %v1591
    %v1904 = vunpack.c.h.b16 %v1591
    %v1905 = vunpack.c.l.b16 %v1592
    %v1906 = vunpack.c.l.b16 %v1593
    %v1907 = vunpack.c.h.b16 %v1593
    %v1908 = vunpack.c.l.b16 %v1594
    %v1909 = vunpack.c.l.b16 %v1595
    %v1910 = vunpack.c.h.b16 %v1595
    %v1911 = vunpack.c.l.b16 %v1596
    %v1912 = vunpack.c.l.b16 %v1597
    %v1913 = vunpack.c.h.b16 %v1597
    %v1914 = vunpack.c.l.b16 %v1598
    %v1915 = vunpack.c.l.b16 %v1599
    %v1916 = vunpack.c.h.b16 %v1599
    %v1917 = vunpack.c.l.b16 %v1600
    %v1918 = vunpack.c.l.b16 %v1601
    %v1919 = vunpack.c.h.b16 %v1601
    %v1920 = vunpack.c.l.b16 %v1602
    %v1921 = vunpack.c.l.b16 %v1603
    %v1922 = vunpack.c.h.b16 %v1603
    %v1923 = vunpack.c.l.b16 %v1604
    %v1924 = vunpack.c.l.b16 %v1605
    %v1925 = vunpack.c.h.b16 %v1605
    %v1926 = vunpack.c.l.b16 %v1606
    %v1927 = vunpack.c.l.b16 %v1607
    %v1928 = vunpack.c.h.b16 %v1607
    %v1929 = vunpack.c.l.b16 %v1608
    %v1930 = vunpack.c.l.b16 %v1609
    %v1931 = vunpack.c.h.b16 %v1609
    %v1932 = vunpack.c.l.b16 %v1610
    %v1933 = vunpack.c.l.b16 %v1611
    %v1934 = vunpack.c.h.b16 %v1611
    %v1935 = vunpack.c.l.b16 %v1612
    %v1936 = vunpack.c.l.b16 %v1613
    %v1937 = vunpack.c.h.b16 %v1613
    %v1938 = vunpack.c.l.b16 %v1614
    %v1939 = vunpack.c.l.b16 %v1615
    %v1940 = vunpack.c.h.b16 %v1615
    %v1941 = vunpack.c.l.b16 %v1616
    %v1942 = vunpack.c.l.b16 %v1617
    %v1943 = vunpack.c.h.b16 %v1617
    %v1944 = vunpack.c.l.b16 %v1618
    %v1945 = vunpack.c.l.b16 %v1619
    %v1946 = vunpack.c.h.b16 %v1619
    %v1947 = vunpack.c.l.b16 %v1620
    %v1948 = vunpack.c.l.b16 %v1621
    %v1949 = vunpack.c.h.b16 %v1621
    %v1950 = vunpack.c.l.b16 %v1622
    %v1951 = vunpack.c.l.b16 %v1623
    %v1952 = vunpack.c.h.b16 %v1623
    %v1953 = vunpack.c.l.b16 %v1624
    %v1954 = vunpack.c.l.b16 %v1625
    %v1955 = vunpack.c.h.b16 %v1625
    %v1956 = vunpack.c.l.b16 %v1626
    %v1957 = vunpack.c.l.b16 %v1627
    %v1958 = vunpack.c.h.b16 %v1627
    %v1959 = vunpack.c.l.b16 %v1628
    %v1960 = vunpack.c.l.b16 %v1629
    %v1961 = vunpack.c.h.b16 %v1629
    %v1962 = vunpack.c.l.b16 %v1630
    %v1963 = vunpack.c.l.b16 %v1631
    %v1964 = vunpack.c.h.b16 %v1631
    %v1965 = vunpack.c.l.b16 %v1632
    %v1966 = vunpack.c.l.b16 %v1633
    %v1967 = vunpack.c.h.b16 %v1633
    %v1968 = vunpack.c.l.b16 %v1634
    %v1969 = vunpack.c.l.b16 %v1635
    %v1970 = vunpack.c.h.b16 %v1635
    %v1971 = vunpack.c.l.b16 %v1636
    %v1972 = vunpack.c.l.b16 %v1637
    %v1973 = vunpack.c.h.b16 %v1637
    %v1974 = vunpack.c.l.b16 %v1638
    %v1975 = vunpack.c.l.b16 %v1639
    %v1976 = vunpack.c.h.b16 %v1639
    %v1977 = vunpack.c.l.b16 %v1640
    %v1978 = vpack.c.b16 %v1789, %v1786
    %v1979 = vpack.c.b16 %v1790, %v1787
    %v1980 = vpack.c.b16 %v1791, %v1788
    %v1981 = vpack.c.b16 %v1795, %v1792
    %v1982 = vpack.c.b16 %v1796, %v1793
    %v1983 = vpack.c.b16 %v1797, %v1794
    %v1984 = vpack.c.b16 %v1801, %v1798
    %v1985 = vpack.c.b16 %v1802, %v1799
    %v1986 = vpack.c.b16 %v1803, %v1800
    %v1987 = vpack.c.b16 %v1807, %v1804
    %v1988 = vpack.c.b16 %v1808, %v1805
    %v1989 = vpack.c.b16 %v1809, %v1806
    %v1990 = vpack.c.b16 %v1813, %v1810
    %v1991 = vpack.c.b16 %v1814, %v1811
    %v1992 = vpack.c.b16 %v1815, %v1812
    %v1993 = vpack.c.b16 %v1819, %v1816
    %v1994 = vpack.c.b16 %v1820, %v1817
    %v1995 = vpack.c.b16 %v1821, %v1818
    %v1996 = vpack.c.b16 %v1825, %v1822
    %v1997 = vpack.c.b16 %v1826, %v1823
    %v1998 = vpack.c.b16 %v1827, %v1824
    %v1999 = vpack.c.b16 %v1831, %v1828
    %v2000 = vpack.c.b16 %v1832, %v1829
    %v2001 = vpack.c.b16 %v1833, %v1830
    %v2002 = vpack.c.b16 %v1837, %v1834
    %v2003 = vpack.c.b16 %v1838, %v1835
    %v2004 = vpack.c.b16 %v1839, %v1836
    %v2005 = vpack.c.b16 %v1843, %v1840
    %v2006 = vpack.c.b16 %v1844, %v1841
    %v2007 = vpack.c.b16 %v1845, %v1842
    %v2008 = vpack.c.b16 %v1849, %v1846
    %v2009 = vpack.c.b16 %v1850, %v1847
    %v2010 = vpack.c.b16 %v1851, %v1848
    %v2011 = vpack.c.b16 %v1855, %v1852
    %v2012 = vpack.c.b16 %v1856, %v1853
    %v2013 = vpack.c.b16 %v1857, %v1854
    %v2014 = vpack.c.b16 %v1861, %v1858
    %v2015 = vpack.c.b16 %v1862, %v1859
    %v2016 = vpack.c.b16 %v1863, %v1860
    %v2017 = vpack.c.b16 %v1867, %v1864
    %v2018 = vpack.c.b16 %v1868, %v1865
    %v2019 = vpack.c.b16 %v1869, %v1866
    %v2020 = vpack.c.b16 %v1873, %v1870
    %v2021 = vpack.c.b16 %v1874, %v1871
    %v2022 = vpack.c.b16 %v1875, %v1872
    %v2023 = vpack.c.b16 %v1879, %v1876
    %v2024 = vpack.c.b16 %v1880, %v1877
    %v2025 = vpack.c.b16 %v1881, %v1878
    %v2026 = vpack.c.b16 %v1885, %v1882
    %v2027 = vpack.c.b16 %v1886, %v1883
    %v2028 = vpack.c.b16 %v1887, %v1884
    %v2029 = vpack.c.b16 %v1891, %v1888
    %v2030 = vpack.c.b16 %v1892, %v1889
    %v2031 = vpack.c.b16 %v1893, %v1890
    %v2032 = vpack.c.b16 %v1897, %v1894
    %v2033 = vpack.c.b16 %v1898, %v1895
    %v2034 = vpack.c.b16 %v1899, %v1896
    %v2035 = vpack.c.b16 %v1903, %v1900
    %v2036 = vpack.c.b16 %v1904, %v1901
    %v2037 = vpack.c.b16 %v1905, %v1902
    %v2038 = vpack.c.b16 %v1909, %v1906
    %v2039 = vpack.c.b16 %v1910, %v1907
    %v2040 = vpack.c.b16 %v1911, %v1908
    %v2041 = vpack.c.b16 %v1915, %v1912
    %v2042 = vpack.c.b16 %v1916, %v1913
    %v2043 = vpack.c.b16 %v1917, %v1914
    %v2044 = vpack.c.b16 %v1921, %v1918
    %v2045 = vpack.c.b16 %v1922, %v1919
    %v2046 = vpack.c.b16 %v1923, %v1920
    %v2047 = vpack.c.b16 %v1927, %v1924
    %v2048 = vpack.c.b16 %v1928, %v1925
    %v2049 = vpack.c.b16 %v1929, %v1926
    %v2050 = vpack.c.b16 %v1933, %v1930
    %v2051 = vpack.c.b16 %v1934, %v1931
    %v2052 = vpack.c.b16 %v1935, %v1932
    %v2053 = vpack.c.b16 %v1939, %v1936
    %v2054 = vpack.c.b16 %v1940, %v1937
    %v2055 = vpack.c.b16 %v1941, %v1938
    %v2056 = vpack.c.b16 %v1945, %v1942
    %v2057 = vpack.c.b16 %v1946, %v1943
    %v2058 = vpack.c.b16 %v1947, %v1944
    %v2059 = vpack.c.b16 %v1951, %v1948
    %v2060 = vpack.c.b16 %v1952, %v1949
    %v2061 = vpack.c.b16 %v1953, %v1950
    %v2062 = vpack.c.b16 %v1957, %v1954
    %v2063 = vpack.c.b16 %v1958, %v1955
    %v2064 = vpack.c.b16 %v1959, %v1956
    %v2065 = vpack.c.b16 %v1963, %v1960
    %v2066 = vpack.c.b16 %v1964, %v1961
    %v2067 = vpack.c.b16 %v1965, %v1962
    %v2068 = vpack.c.b16 %v1969, %v1966
    %v2069 = vpack.c.b16 %v1970, %v1967
    %v2070 = vpack.c.b16 %v1971, %v1968
    %v2071 = vpack.c.b16 %v1975, %v1972
    %v2072 = vpack.c.b16 %v1976, %v1973
    %v2073 = vpack.c.b16 %v1977, %v1974
    %2170 = vmatprep.subr.bf16.mxu0 %v2000
    %2171 = vmatpush1.bf16.msra.mxu0 %v1999
    %2172 = vmatprep.subr.bf16.mxu0 %v1997
    %2173 = vmatpush1.bf16.msra.mxu0 %v1996
    %2174 = vmatprep.subr.bf16.mxu0 %v1994
    %2175 = vmatpush1.bf16.msra.mxu0 %v1993
    %2176 = vmatprep.subr.bf16.mxu0 %v1991
    %2177 = vmatpush1.bf16.msra.mxu0 %v1990
    %2178 = vmatprep.subr.bf16.mxu0 %v1988
    %2179 = vmatpush1.bf16.msra.mxu0 %v1987
    %2180 = vmatprep.subr.bf16.mxu0 %v1985
    %2181 = vmatpush1.bf16.msra.mxu0 %v1984
    %2182 = vmatprep.subr.bf16.mxu0 %v1982
    %2183 = vmatpush1.bf16.msra.mxu0 %v1981
    %2184 = vmatprep.subr.bf16.mxu0 %v1979
    %2185 = vmatpush1.bf16.msra.mxu0 %v1978
    %2186 = vmatprep.subr.bf16.mxu0 %v2024
    %2187 = vmatpush2.bf16.msra.mxu0 %v2023
    %2188 = vmatprep.subr.bf16.mxu0 %v2021
    %2189 = vmatpush2.bf16.msra.mxu0 %v2020
    %2190 = vmatprep.subr.bf16.mxu0 %v2018
    %2191 = vmatpush2.bf16.msra.mxu0 %v2017
    %2192 = vmatprep.subr.bf16.mxu0 %v2015
    %2193 = vmatpush2.bf16.msra.mxu0 %v2014
    %2194 = vmatprep.subr.bf16.mxu0 %v2012
    %2195 = vmatpush2.bf16.msra.mxu0 %v2011
    %2196 = vmatprep.subr.bf16.mxu0 %v2009
    %2197 = vmatpush2.bf16.msra.mxu0 %v2008
    %2198 = vmatprep.subr.bf16.mxu0 %v2006
    %2199 = vmatpush2.bf16.msra.mxu0 %v2005
    %2200 = vmatprep.subr.bf16.mxu0 %v2003
    %2201 = vmatpush2.bf16.msra.mxu0 %v2002
    %2202 = vmatprep.mubr.bf16.mxu0 %v1510
    %2203 = vmatmul.mubr.bf16.gmra.mxu0 %v1509
    %v2204 = vpop.f32.mrf.mxu0
    %v2205 = vadd.f32 %v1646, %v2204
    %v2206 = vpop.f32.mrf.mxu0
    %v2207 = vadd.f32 %v1650, %v2206
    %v2208 = vpop.f32.mrf.mxu0
    %v2209 = vpop.f32.mrf.mxu0
    %2210 = vdwg.mxu0
    %2211 = vmatprep.subr.bf16.mxu0 %v2048
    %2212 = vmatpush1.bf16.msra.mxu0 %v2047
    %2213 = vmatprep.subr.bf16.mxu0 %v2045
    %2214 = vmatpush1.bf16.msra.mxu0 %v2044
    %2215 = vmatprep.subr.bf16.mxu0 %v2042
    %2216 = vmatpush1.bf16.msra.mxu0 %v2041
    %2217 = vmatprep.subr.bf16.mxu0 %v2039
    %2218 = vmatpush1.bf16.msra.mxu0 %v2038
    %2219 = vmatprep.subr.bf16.mxu0 %v2036
    %2220 = vmatpush1.bf16.msra.mxu0 %v2035
    %2221 = vmatprep.subr.bf16.mxu0 %v2033
    %2222 = vmatpush1.bf16.msra.mxu0 %v2032
    %2223 = vmatprep.subr.bf16.mxu0 %v2030
    %2224 = vmatpush1.bf16.msra.mxu0 %v2029
    %2225 = vmatprep.subr.bf16.mxu0 %v2027
    %2226 = vmatpush1.bf16.msra.mxu0 %v2026
    %2227 = vmatprep.subr.bf16.mxu0 %v2072
    %2228 = vmatpush2.bf16.msra.mxu0 %v2071
    %2229 = vmatprep.subr.bf16.mxu0 %v2069
    %2230 = vmatpush2.bf16.msra.mxu0 %v2068
    %2231 = vmatprep.subr.bf16.mxu0 %v2066
    %2232 = vmatpush2.bf16.msra.mxu0 %v2065
    %2233 = vmatprep.subr.bf16.mxu0 %v2063
    %2234 = vmatpush2.bf16.msra.mxu0 %v2062
    %2235 = vmatprep.subr.bf16.mxu0 %v2060
    %2236 = vmatpush2.bf16.msra.mxu0 %v2059
    %2237 = vmatprep.subr.bf16.mxu0 %v2057
    %2238 = vmatpush2.bf16.msra.mxu0 %v2056
    %2239 = vmatprep.subr.bf16.mxu0 %v2054
    %2240 = vmatpush2.bf16.msra.mxu0 %v2053
    %2241 = vmatprep.subr.bf16.mxu0 %v2051
    %2242 = vmatpush2.bf16.msra.mxu0 %v2050
    %2243 = vmatprep.mubr.bf16.mxu0 %v1512
    %2244 = vmatmul.mubr.bf16.gmra.mxu0 %v1511
    %v2245 = vpop.f32.mrf.mxu0
    %v2246 = vadd.f32 %v2205, %v2245
    %v2247 = vpop.f32.mrf.mxu0
    %v2248 = vadd.f32 %v2207, %v2247
    %v2249 = vpop.f32.mrf.mxu0
    %v2250 = vpop.f32.mrf.mxu0
    %2251 = vdwg.mxu0
    %2252 = vmatprep.subr.bf16.mxu0 0
    %2253 = vmatpush1.bf16.msra.mxu0 %v2001
    %2254 = vmatprep.subr.bf16.mxu0 0
    %2255 = vmatpush1.bf16.msra.mxu0 %v1998
    %2256 = vmatprep.subr.bf16.mxu0 0
    %2257 = vmatpush1.bf16.msra.mxu0 %v1995
    %2258 = vmatprep.subr.bf16.mxu0 0
    %2259 = vmatpush1.bf16.msra.mxu0 %v1992
    %2260 = vmatprep.subr.bf16.mxu0 0
    %2261 = vmatpush1.bf16.msra.mxu0 %v1989
    %2262 = vmatprep.subr.bf16.mxu0 0
    %2263 = vmatpush1.bf16.msra.mxu0 %v1986
    %2264 = vmatprep.subr.bf16.mxu0 0
    %2265 = vmatpush1.bf16.msra.mxu0 %v1983
    %2266 = vmatprep.subr.bf16.mxu0 0
    %2267 = vmatpush1.bf16.msra.mxu0 %v1980
    %2268 = vmatprep.subr.bf16.mxu0 0
    %2269 = vmatpush2.bf16.msra.mxu0 %v2025
    %2270 = vmatprep.subr.bf16.mxu0 0
    %2271 = vmatpush2.bf16.msra.mxu0 %v2022
    %2272 = vmatprep.subr.bf16.mxu0 0
    %2273 = vmatpush2.bf16.msra.mxu0 %v2019
    %2274 = vmatprep.subr.bf16.mxu0 0
    %2275 = vmatpush2.bf16.msra.mxu0 %v2016
    %2276 = vmatprep.subr.bf16.mxu0 0
    %2277 = vmatpush2.bf16.msra.mxu0 %v2013
    %2278 = vmatprep.subr.bf16.mxu0 0
    %2279 = vmatpush2.bf16.msra.mxu0 %v2010
    %2280 = vmatprep.subr.bf16.mxu0 0
    %2281 = vmatpush2.bf16.msra.mxu0 %v2007
    %2282 = vmatprep.subr.bf16.mxu0 0
    %2283 = vmatpush2.bf16.msra.mxu0 %v2004
    %2284 = vmatprep.mubr.bf16.mxu0 %v1510
    %2285 = vmatmul.mubr.bf16.gmra.mxu0 %v1509
    %v2286 = vpop.f32.mrf.mxu0
    %v2287 = vadd.f32 %v1654, %v2286
    %v2288 = vpop.f32.mrf.mxu0
    %v2289 = vpop.f32.mrf.mxu0
    %v2290 = vpop.f32.mrf.mxu0
    %2291 = vdwg.mxu0
    %2292 = vmatprep.subr.bf16.mxu0 0
    %2293 = vmatpush1.bf16.msra.mxu0 %v2049
    %2294 = vmatprep.subr.bf16.mxu0 0
    %2295 = vmatpush1.bf16.msra.mxu0 %v2046
    %2296 = vmatprep.subr.bf16.mxu0 0
    %2297 = vmatpush1.bf16.msra.mxu0 %v2043
    %2298 = vmatprep.subr.bf16.mxu0 0
    %2299 = vmatpush1.bf16.msra.mxu0 %v2040
    %2300 = vmatprep.subr.bf16.mxu0 0
    %2301 = vmatpush1.bf16.msra.mxu0 %v2037
    %2302 = vmatprep.subr.bf16.mxu0 0
    %2303 = vmatpush1.bf16.msra.mxu0 %v2034
    %2304 = vmatprep.subr.bf16.mxu0 0
    %2305 = vmatpush1.bf16.msra.mxu0 %v2031
    %2306 = vmatprep.subr.bf16.mxu0 0
    %2307 = vmatpush1.bf16.msra.mxu0 %v2028
    %2308 = vmatprep.subr.bf16.mxu0 0
    %2309 = vmatpush2.bf16.msra.mxu0 %v2073
    %2310 = vmatprep.subr.bf16.mxu0 0
    %2311 = vmatpush2.bf16.msra.mxu0 %v2070
    %2312 = vmatprep.subr.bf16.mxu0 0
    %2313 = vmatpush2.bf16.msra.mxu0 %v2067
    %2314 = vmatprep.subr.bf16.mxu0 0
    %2315 = vmatpush2.bf16.msra.mxu0 %v2064
    %2316 = vmatprep.subr.bf16.mxu0 0
    %2317 = vmatpush2.bf16.msra.mxu0 %v2061
    %2318 = vmatprep.subr.bf16.mxu0 0
    %2319 = vmatpush2.bf16.msra.mxu0 %v2058
    %2320 = vmatprep.subr.bf16.mxu0 0
    %2321 = vmatpush2.bf16.msra.mxu0 %v2055
    %2322 = vmatprep.subr.bf16.mxu0 0
    %2323 = vmatpush2.bf16.msra.mxu0 %v2052
    %2324 = vmatprep.mubr.bf16.mxu0 %v1512
    %2325 = vmatmul.mubr.bf16.gmra.mxu0 %v1511
    %v2326 = vpop.f32.mrf.mxu0
    %v2327 = vadd.f32 %v2287, %v2326
    %v2328 = vpop.f32.mrf.mxu0
    %v2329 = vpop.f32.mrf.mxu0
    %v2330 = vpop.f32.mrf.mxu0
    %2331 = vdwg.mxu0
    %2332 = vst [vmem:[#allocation10] sm:$0xff] %v2246
    %2333 = vst [vmem:[#allocation10 + $0x8] sm:$0xff] %v2248
    %2334 = vst [vmem:[#allocation10 + $0x10] sm:$0xff] %v2327
    // Predicated region
    $region38: #{tpu_custom_call.1} parent=1 // pred_check
      _
    $region39: #{tpu_custom_call.1} parent=1 // pred_check_branch
      %2336 = sbr.rel (0) target = $region41
    $region40: #{tpu_custom_call.1} parent=1 // pred_region
      %s2338 = ssub.s32 384, 384
      %2339 = vsyncadd [#allocation4], %s2338
      %s2341 = sshll.u32 [#allocation10], 4
      %s2342 = int_to_ptr.vmem [resolvable:$true] %s2341
      %2344 = dma.vmem_to_hbm [thread:$0]  %s2342, 384, %s5, [#allocation4]
    $region41: #{tpu_custom_call.1} parent=1 // pred_fallthru
      _
    // Predicated region
    $region42: #{tpu_custom_call.1} parent=1 // pred_check
      _
    $region43: #{tpu_custom_call.1} parent=1 // pred_check_branch
      %2346 = sbr.rel (0) target = $region45
    $region44: #{tpu_custom_call.1} parent=1 // pred_region
      %2347 = dma.done [#allocation4], 384
    $region45: #{tpu_custom_call.1} parent=1 // pred_fallthru
      _
    %2348 = vsyncpa [#allocation3], 1
    %2349 = vsyncpa [#allocation6], 1
    %2350 = vsyncpa [#allocation9], 1
    %2351 = vsyncpa [#allocation4], 1

</llo_original>
